<compile_context>
chip_gen: v7x
topology: tpu7x:2x2x1
jax: 0.10.0
libtpu: 0.0.40
codegen_flags: <defaults>
</compile_context>

<pallas_src>
import functools

import jax
import jax.numpy as jnp
from jax.experimental import pallas as pl
from jax.experimental.pallas import tpu as pltpu

LN_EPS = 1e-5
NEG_INF = -1e9
LANE = 128


def _round_up(x, m):
    return ((x + m - 1) // m) * m


def _layer_norm(x, w, b):
    mu = jnp.mean(x, axis=-1, keepdims=True)
    var = jnp.mean((x - mu) ** 2, axis=-1, keepdims=True)
    return (x - mu) * jax.lax.rsqrt(var + LN_EPS) * w + b


def _gelu(x):
    # TODO(synk): ESM/PyTorch use exact erf-GELU; tanh approximation is used here
    # because erf lowering is not guaranteed in Mosaic.
    return jax.nn.gelu(x, approximate=True)


# ----------------------------------------------------------------------------
# Fused transformer STACK kernel (all L layers), grid = (B, L)
# Residual kept in VMEM scratch across the L axis; weights stream per (b, l).
# ----------------------------------------------------------------------------
def stack_kernel(
        x_ref, kbias_ref,
        ln1_w, ln1_b, wqkv, bqkv, wo, bo,
        ln2_w, ln2_b, fc1_w, fc1_b, fc2_w, fc2_b,
        out_ref, xres, *, num_heads):
    l = pl.program_id(1)

    @pl.when(l == 0)
    def _():
        xres[...] = x_ref[0]                       # load residual for this batch elem

    x = xres[...]                                  # (S, D) f32 residual
    S, D = x.shape
    dh = D // num_heads
    scale = dh ** -0.5

    # Hoist the key-padding bias broadcast (done once, not per head).
    kbias_full = jnp.broadcast_to(kbias_ref[0], (S, S))   # (S, S) additive bias

    # --- self attention (pre-LayerNorm) ---
    h = _layer_norm(x, ln1_w[0], ln1_b[0])
    h_bf = h.astype(jnp.bfloat16)
    qkv = jnp.dot(h_bf, wqkv[0], preferred_element_type=jnp.float32) + bqkv[0]  # (S, 3D)
    q = qkv[:, :D] * scale
    k = qkv[:, D:2 * D]
    v = qkv[:, 2 * D:]

    # Head-batched attention: (H, S, dh) layout, no per-head lane slicing loop.
    qh = jnp.transpose(q.reshape(S, num_heads, dh), (1, 0, 2)).astype(jnp.bfloat16)
    kh = jnp.transpose(k.reshape(S, num_heads, dh), (1, 0, 2)).astype(jnp.bfloat16)
    vh = jnp.transpose(v.reshape(S, num_heads, dh), (1, 0, 2)).astype(jnp.bfloat16)

    # TODO(synk): at realistic ESM dims (S, D large) this (H, S, S) scores block
    # should be flash-style tiled over queries/keys instead of materialized.
    scores = jnp.einsum('hqd,hkd->hqk', qh, kh,
                        preferred_element_type=jnp.float32)          # (H, S, S)
    scores = scores + kbias_full[None, :, :]
    m = jnp.max(scores, axis=-1, keepdims=True)
    e = jnp.exp(scores - m)
    p = e * pl.reciprocal(jnp.sum(e, axis=-1, keepdims=True), approx=True)

    ctx = jnp.einsum('hqk,hkd->hqd', p.astype(jnp.bfloat16), vh,
                     preferred_element_type=jnp.float32)              # (H, S, dh)
    ctx = jnp.transpose(ctx, (1, 0, 2)).reshape(S, D)                 # concat heads

    attn = jnp.dot(ctx.astype(jnp.bfloat16), wo[0],
                   preferred_element_type=jnp.float32) + bo[0]        # full-K proj
    x = x + attn

    # --- feed forward (pre-LayerNorm) ---
    # TODO(synk): at realistic ESM dims add a K-tiling grid axis over the FFN so
    # fc1/fc2 stream in chunks and fit v7x's 64 MiB VMEM.
    h2 = _layer_norm(x, ln2_w[0], ln2_b[0])
    f = jnp.dot(h2.astype(jnp.bfloat16), fc1_w[0],
                preferred_element_type=jnp.float32) + fc1_b[0]
    f = _gelu(f)
    f = jnp.dot(f.astype(jnp.bfloat16), fc2_w[0],
                preferred_element_type=jnp.float32) + fc2_b[0]
    x = x + f

    xres[...] = x

    @pl.when(l == pl.num_programs(1) - 1)
    def _():
        out_ref[0] = x


# ----------------------------------------------------------------------------
# Fused final LayerNorm + LM head (tied weights) + Atchley head, grid = (B,)
# Logit / Atchley outputs are lane-padded to multiples of 128 (sliced in wrapper).
# ----------------------------------------------------------------------------
def head_kernel(
        x_ref,
        ln_w, ln_b,
        lm_dense_w, lm_dense_b, lm_ln_w, lm_ln_b, lm_out_w, lm_out_b,
        af1_w, af1_b, af_ln_w, af_ln_b, af2_w, af2_b,
        rep_ref, logits_ref, af_ref):
    x = x_ref[0]                                              # (S, D)
    rep = _layer_norm(x, ln_w[...], ln_b[...])
    rep_ref[0] = rep

    # LM head: dense -> gelu -> layer_norm -> tied linear + bias (padded vocab)
    h = jnp.dot(rep.astype(jnp.bfloat16), lm_dense_w[...],
                preferred_element_type=jnp.float32) + lm_dense_b[...]
    h = _gelu(h)
    h = _layer_norm(h, lm_ln_w[...], lm_ln_b[...])
    logits_ref[0] = (jnp.dot(h.astype(jnp.bfloat16), lm_out_w[...],
                             preferred_element_type=jnp.float32) + lm_out_b[...])

    # Atchley-factor head: Linear -> ReLU -> LayerNorm -> Linear(D, 5 padded to 128)
    a = jnp.dot(rep.astype(jnp.bfloat16), af1_w[...],
                preferred_element_type=jnp.float32) + af1_b[...]
    a = jnp.maximum(a, 0.0)
    a = _layer_norm(a, af_ln_w[...], af_ln_b[...])
    af_ref[0] = jnp.dot(a.astype(jnp.bfloat16), af2_w[...],
                        preferred_element_type=jnp.float32) + af2_b[...]


# ----------------------------------------------------------------------------
# pallas_call wrappers
# ----------------------------------------------------------------------------
def _full_spec(shape):
    n = len(shape)
    return pl.BlockSpec(shape, lambda b, n=n: (0,) * n)


def run_stack(x, kbias, stacked_layer_params, *, num_heads):
    B, S, D = x.shape
    L = stacked_layer_params[0].shape[0]
    # Per-layer weight blocks: (1, ...) slab of the (L, ...) stacked param.
    w_specs = [
        pl.BlockSpec((1,) + p.shape[1:], lambda b, l, n=p.ndim - 1: (l,) + (0,) * n)
        for p in stacked_layer_params
    ]
    return pl.pallas_call(
        functools.partial(stack_kernel, num_heads=num_heads),
        out_shape=jax.ShapeDtypeStruct((B, S, D), jnp.float32),
        grid=(B, L),
        in_specs=[pl.BlockSpec((1, S, D), lambda b, l: (b, 0, 0)),
                  pl.BlockSpec((1, 1, S), lambda b, l: (b, 0, 0))] + w_specs,
        out_specs=pl.BlockSpec((1, S, D), lambda b, l: (b, 0, 0)),
        scratch_shapes=[pltpu.VMEM((S, D), jnp.float32)],      # VMEM-resident residual
        compiler_params=pltpu.CompilerParams(
            dimension_semantics=("parallel", "arbitrary"),
            vmem_limit_bytes=32 * 1024 * 1024),
    )(x, kbias, *stacked_layer_params)


def run_heads(x, head_params):
    B, S, D = x.shape
    VP = head_params[7].shape[1]   # lm_out_b : (1, VP)  (vocab padded to 128-mult)
    AP = head_params[13].shape[1]  # af2_b    : (1, AP)
    out_shapes = (jax.ShapeDtypeStruct((B, S, D), jnp.float32),
                  jax.ShapeDtypeStruct((B, S, VP), jnp.float32),
                  jax.ShapeDtypeStruct((B, S, AP), jnp.float32))
    out_specs = (pl.BlockSpec((1, S, D), lambda b: (b, 0, 0)),
                 pl.BlockSpec((1, S, VP), lambda b: (b, 0, 0)),
                 pl.BlockSpec((1, S, AP), lambda b: (b, 0, 0)))
    return pl.pallas_call(
        head_kernel,
        out_shape=out_shapes,
        grid=(B,),
        in_specs=[pl.BlockSpec((1, S, D), lambda b: (b, 0, 0))]
                 + [_full_spec(p.shape) for p in head_params],
        out_specs=out_specs,
        compiler_params=pltpu.CompilerParams(dimension_semantics=("parallel",)),
    )(x, *head_params)


# ----------------------------------------------------------------------------
# Parameters (deterministic synthetic init; shapes follow ProteinLM.__init__)
# Matmul weights stored in bf16 (MXU-native); LN params and biases in f32.
# ----------------------------------------------------------------------------
def init_params(key, *, vocab, dim, ffn, n_layers, max_seq, padding_idx):
    key_box = [key]

    def nxt():
        key_box[0], sub = jax.random.split(key_box[0])
        return sub

    def w(shape, scale=0.02):
        return scale * jax.random.normal(nxt(), shape, dtype=jnp.float32)

    wbf = lambda shape: w(shape).astype(jnp.bfloat16)
    ones = lambda shape: jnp.ones(shape, jnp.float32)
    zeros = lambda shape: jnp.zeros(shape, jnp.float32)

    embed = w((vocab, dim)).at[padding_idx].set(0.0)   # nn.Embedding padding row = 0
    pos_embed = w((max_seq, dim))                      # learned absolute positions

    layers = []
    for _ in range(n_layers):
        layers.append([
            ones((1, dim)), zeros((1, dim)),           # self_attn layer_norm
            wbf((dim, 3 * dim)), zeros((1, 3 * dim)),  # fused q/k/v proj
            wbf((dim, dim)), zeros((1, dim)),          # out proj
            ones((1, dim)), zeros((1, dim)),           # final layer_norm
            wbf((dim, ffn)), zeros((1, ffn)),          # fc1 (D -> 2D)
            wbf((ffn, dim)), zeros((1, dim)),          # fc2 (2D -> D)
        ])
    # Stack per-layer params into (L, ...) arrays for the single-pallas_call stack.
    stacked = [jnp.stack([layers[l][i] for l in range(n_layers)])
               for i in range(len(layers[0]))]

    # Lane-dense heads: pad vocab and Atchley dims up to multiples of 128.
    VP = _round_up(vocab, LANE)
    AP = _round_up(5, LANE)
    lm_out_w = jnp.zeros((dim, VP), jnp.bfloat16).at[:, :vocab].set(
        embed.T.astype(jnp.bfloat16))                  # tied output projection
    af2_w = jnp.zeros((dim, AP), jnp.bfloat16).at[:, :5].set(
        w((dim, 5)).astype(jnp.bfloat16))

    head = [
        ones((1, dim)), zeros((1, dim)),               # model-level layer_norm
        wbf((dim, dim)), zeros((1, dim)),              # lm_head.dense
        ones((1, dim)), zeros((1, dim)),               # lm_head.layer_norm
        lm_out_w, zeros((1, VP)),                      # tied output proj (padded) + bias
        wbf((dim, dim)), zeros((1, dim)),              # atchely linear1
        ones((1, dim)), zeros((1, dim)),               # atchely layer_norm
        af2_w, zeros((1, AP)),                         # atchely linear2 (D -> 5, padded)
    ]
    return {'embed_tokens': embed, 'pos_embed': pos_embed,
            'layers_stacked': stacked, 'head': head, 'vocab': vocab}


# ----------------------------------------------------------------------------
# Forward (matches ProteinLM.forward with token_dropout=False, dropout=0)
# ----------------------------------------------------------------------------
def protein_lm_forward(tokens, params, *, num_heads, padding_idx):
    B, S = tokens.shape
    V = params['vocab']
    x = params['embed_tokens'][tokens]                         # glue: embedding gather
    # TODO(synk): _forward_position_encoding is abstract in ProteinLM; a learned
    # absolute positional embedding is used as the concrete instantiation.
    x = x + params['pos_embed'][:S][None, :, :]
    pad = tokens == padding_idx
    x = x * (1.0 - pad[..., None].astype(x.dtype))             # zero padded tokens
    kbias = jnp.where(pad, NEG_INF, 0.0).astype(jnp.float32).reshape(B, 1, S)

    x = run_stack(x, kbias, params['layers_stacked'], num_heads=num_heads)
    rep, logits_p, af_p = run_heads(x, params['head'])
    # Slice the lane-padded head outputs back to their true widths.
    return {'logits': logits_p[..., :V],
            'atchely_factor': af_p[..., :5],
            'rep': rep}


if __name__ == "__main__":
    # synthetic IUPAC-like alphabet: specials <pad>=0, <mask>=1, <cls>=2, <eos>=3,
    # followed by 21 residue tokens -> vocab of 25
    VOCAB, PAD_IDX = 25, 0
    B, S = 2, 8
    DIM, HEADS, FFN, LAYERS, MAX_SEQ = 32, 4, 64, 2, 16

    root = jax.random.PRNGKey(0)
    tok_key, param_key = jax.random.split(root)
    tokens = jax.random.randint(tok_key, (B, S), 4, VOCAB, dtype=jnp.int32)

    params = init_params(param_key, vocab=VOCAB, dim=DIM, ffn=FFN,
                         n_layers=LAYERS, max_seq=MAX_SEQ, padding_idx=PAD_IDX)

    out = protein_lm_forward(tokens, params, num_heads=HEADS, padding_idx=PAD_IDX)
    out = jax.tree_util.tree_map(jax.block_until_ready, out)

    assert out['logits'].shape == (B, S, VOCAB)
    assert out['atchely_factor'].shape == (B, S, 5)
    assert out['rep'].shape == (B, S, DIM)
    assert all(bool(jnp.isfinite(v).all()) for v in out.values())
    print("KERNEL_OK")
</pallas_src>

<mosaic_0001>
module attributes {stable_mosaic.version = 11 : i64} {
  func.func @stack_kernel(%arg0: i32, %arg1: i32, %arg2: memref<1x8x32xf32, #tpu.memory_space<vmem>>, %arg3: memref<1x1x8xf32, #tpu.memory_space<vmem>>, %arg4: memref<1x1x32xf32, #tpu.memory_space<vmem>>, %arg5: memref<1x1x32xf32, #tpu.memory_space<vmem>>, %arg6: memref<1x32x96xbf16, #tpu.memory_space<vmem>>, %arg7: memref<1x1x96xf32, #tpu.memory_space<vmem>>, %arg8: memref<1x32x32xbf16, #tpu.memory_space<vmem>>, %arg9: memref<1x1x32xf32, #tpu.memory_space<vmem>>, %arg10: memref<1x1x32xf32, #tpu.memory_space<vmem>>, %arg11: memref<1x1x32xf32, #tpu.memory_space<vmem>>, %arg12: memref<1x32x64xbf16, #tpu.memory_space<vmem>>, %arg13: memref<1x1x64xf32, #tpu.memory_space<vmem>>, %arg14: memref<1x64x32xbf16, #tpu.memory_space<vmem>>, %arg15: memref<1x1x32xf32, #tpu.memory_space<vmem>>, %arg16: memref<1x8x32xf32, #tpu.memory_space<vmem>>, %arg17: memref<8x32xf32, #tpu.memory_space<vmem>>) attributes {dimension_semantics = [#tpu.dimension_semantics<parallel>, #tpu.dimension_semantics<arbitrary>], iteration_bounds = array<i64: 2, 2>, scalar_prefetch = 0 : i64, scratch_operands = 1 : i64, tpu.core_type = #tpu.core_type<tc>, window_params = [{transform_indices = @transform_0, window_bounds = array<i64: 1, 8, 32>}, {transform_indices = @transform_1, window_bounds = array<i64: 1, 1, 8>}, {transform_indices = @transform_2, window_bounds = array<i64: 1, 1, 32>}, {transform_indices = @transform_3, window_bounds = array<i64: 1, 1, 32>}, {transform_indices = @transform_4, window_bounds = array<i64: 1, 32, 96>}, {transform_indices = @transform_5, window_bounds = array<i64: 1, 1, 96>}, {transform_indices = @transform_6, window_bounds = array<i64: 1, 32, 32>}, {transform_indices = @transform_7, window_bounds = array<i64: 1, 1, 32>}, {transform_indices = @transform_8, window_bounds = array<i64: 1, 1, 32>}, {transform_indices = @transform_9, window_bounds = array<i64: 1, 1, 32>}, {transform_indices = @transform_10, window_bounds = array<i64: 1, 32, 64>}, {transform_indices = @transform_11, window_bounds = array<i64: 1, 1, 64>}, {transform_indices = @transform_12, window_bounds = array<i64: 1, 64, 32>}, {transform_indices = @transform_13, window_bounds = array<i64: 1, 1, 32>}, {transform_indices = @transform_14, window_bounds = array<i64: 1, 8, 32>}]} {
    %c0_i32 = arith.constant 0 : i32
    %0 = arith.cmpi eq, %arg1, %c0_i32 : i32
    %1 = arith.extui %0 : i1 to i32
    %c0_i32_0 = arith.constant 0 : i32
    %2 = arith.cmpi ne, %1, %c0_i32_0 : i32
    scf.if %2 {
      %c0_66 = arith.constant 0 : index
      %c0_67 = arith.constant 0 : index
      %c0_68 = arith.constant 0 : index
      %143 = vector.load %arg2[%c0_66, %c0_67, %c0_68] : memref<1x8x32xf32, #tpu.memory_space<vmem>>, vector<1x8x32xf32>
      %144 = vector.shape_cast %143 : vector<1x8x32xf32> to vector<8x32xf32>
      %c0_69 = arith.constant 0 : index
      %c0_70 = arith.constant 0 : index
      %145 = vector.load %arg17[%c0_69, %c0_70] : memref<8x32xf32, #tpu.memory_space<vmem>>, vector<8x32xf32>
      tpu.vector_store %arg17[%c0_69, %c0_70], %144 {strides = array<i32>} : memref<8x32xf32, #tpu.memory_space<vmem>>, vector<8x32xf32>,
    } else {
    }
    %c0 = arith.constant 0 : index
    %c0_1 = arith.constant 0 : index
    %3 = vector.load %arg17[%c0, %c0_1] : memref<8x32xf32, #tpu.memory_space<vmem>>, vector<8x32xf32>
    %c0_2 = arith.constant 0 : index
    %c0_3 = arith.constant 0 : index
    %c0_4 = arith.constant 0 : index
    %4 = vector.load %arg3[%c0_2, %c0_3, %c0_4] : memref<1x1x8xf32, #tpu.memory_space<vmem>>, vector<1x1x8xf32>
    %5 = vector.shape_cast %4 : vector<1x1x8xf32> to vector<1x8xf32>
    %6 = vector.shape_cast %5 : vector<1x8xf32> to vector<1x8xf32>
    %7 = vector.broadcast %6 : vector<1x8xf32> to vector<8x8xf32>
    %c0_5 = arith.constant 0 : index
    %c0_6 = arith.constant 0 : index
    %c0_7 = arith.constant 0 : index
    %8 = vector.load %arg4[%c0_5, %c0_6, %c0_7] : memref<1x1x32xf32, #tpu.memory_space<vmem>>, vector<1x1x32xf32>
    %9 = vector.shape_cast %8 : vector<1x1x32xf32> to vector<1x32xf32>
    %c0_8 = arith.constant 0 : index
    %c0_9 = arith.constant 0 : index
    %c0_10 = arith.constant 0 : index
    %10 = vector.load %arg5[%c0_8, %c0_9, %c0_10] : memref<1x1x32xf32, #tpu.memory_space<vmem>>, vector<1x1x32xf32>
    %11 = vector.shape_cast %10 : vector<1x1x32xf32> to vector<1x32xf32>
    %cst = arith.constant dense<0.000000e+00> : vector<8xf32>
    %12 = vector.multi_reduction <add>, %3, %cst [1] : vector<8x32xf32> to vector<8xf32>
    %13 = vector.shape_cast %12 : vector<8xf32> to vector<8x1xf32>
    %cst_11 = arith.constant 3.200000e+01 : f32
    %14 = vector.broadcast %cst_11 : f32 to vector<8x1xf32>
    %15 = arith.divf %13, %14 : vector<8x1xf32>
    %16 = vector.broadcast %15 : vector<8x1xf32> to vector<8x32xf32>
    %17 = arith.subf %3, %16 : vector<8x32xf32>
    %18 = arith.mulf %17, %17 : vector<8x32xf32>
    %cst_12 = arith.constant dense<0.000000e+00> : vector<8xf32>
    %19 = vector.multi_reduction <add>, %18, %cst_12 [1] : vector<8x32xf32> to vector<8xf32>
    %20 = vector.shape_cast %19 : vector<8xf32> to vector<8x1xf32>
    %cst_13 = arith.constant 3.200000e+01 : f32
    %21 = vector.broadcast %cst_13 : f32 to vector<8x1xf32>
    %22 = arith.divf %20, %21 : vector<8x1xf32>
    %23 = vector.broadcast %15 : vector<8x1xf32> to vector<8x32xf32>
    %24 = arith.subf %3, %23 : vector<8x32xf32>
    %cst_14 = arith.constant 9.99999974E-6 : f32
    %25 = vector.broadcast %cst_14 : f32 to vector<8x1xf32>
    %26 = arith.addf %22, %25 : vector<8x1xf32>
    %27 = math.rsqrt %26 : vector<8x1xf32>
    %28 = vector.broadcast %27 : vector<8x1xf32> to vector<8x32xf32>
    %29 = arith.mulf %24, %28 : vector<8x32xf32>
    %30 = vector.broadcast %9 : vector<1x32xf32> to vector<8x32xf32>
    %31 = arith.mulf %29, %30 : vector<8x32xf32>
    %32 = vector.broadcast %11 : vector<1x32xf32> to vector<8x32xf32>
    %33 = arith.addf %31, %32 : vector<8x32xf32>
    %34 = arith.truncf %33 : vector<8x32xf32> to vector<8x32xbf16>
    %c0_15 = arith.constant 0 : index
    %c0_16 = arith.constant 0 : index
    %c0_17 = arith.constant 0 : index
    %35 = vector.load %arg6[%c0_15, %c0_16, %c0_17] : memref<1x32x96xbf16, #tpu.memory_space<vmem>>, vector<1x32x96xbf16>
    %36 = vector.shape_cast %35 : vector<1x32x96xbf16> to vector<32x96xbf16>
    %cst_18 = arith.constant dense<0.000000e+00> : vector<8x96xf32>
    %37 = tpu.matmul %34, %36, %cst_18 {dimension_numbers = #tpu.dot_dimension_numbers<[1], [0], [0], [1], [0, 0, 1, 1], [], []>} : vector<8x32xbf16>, vector<32x96xbf16>, vector<8x96xf32> -> vector<8x96xf32>
    %c0_19 = arith.constant 0 : index
    %c0_20 = arith.constant 0 : index
    %c0_21 = arith.constant 0 : index
    %38 = vector.load %arg7[%c0_19, %c0_20, %c0_21] : memref<1x1x96xf32, #tpu.memory_space<vmem>>, vector<1x1x96xf32>
    %39 = vector.shape_cast %38 : vector<1x1x96xf32> to vector<1x96xf32>
    %40 = vector.broadcast %39 : vector<1x96xf32> to vector<8x96xf32>
    %41 = arith.addf %37, %40 : vector<8x96xf32>
    %42 = vector.extract_strided_slice %41 {offsets = [0, 0], sizes = [8, 32], strides = [1, 1]} : vector<8x96xf32> to vector<8x32xf32>
    %cst_22 = arith.constant 0.353553385 : f32
    %43 = vector.broadcast %cst_22 : f32 to vector<8x32xf32>
    %44 = arith.mulf %42, %43 : vector<8x32xf32>
    %45 = vector.extract_strided_slice %41 {offsets = [0, 32], sizes = [8, 32], strides = [1, 1]} : vector<8x96xf32> to vector<8x32xf32>
    %46 = vector.extract_strided_slice %41 {offsets = [0, 64], sizes = [8, 32], strides = [1, 1]} : vector<8x96xf32> to vector<8x32xf32>
    %47 = vector.shape_cast %44 : vector<8x32xf32> to vector<8x4x8xf32>
    %48 = tpu.transpose %47, [1, 0, 2] : vector<8x4x8xf32> -> vector<4x8x8xf32>
    %49 = arith.truncf %48 : vector<4x8x8xf32> to vector<4x8x8xbf16>
    %50 = vector.shape_cast %45 : vector<8x32xf32> to vector<8x4x8xf32>
    %51 = tpu.transpose %50, [1, 0, 2] : vector<8x4x8xf32> -> vector<4x8x8xf32>
    %52 = arith.truncf %51 : vector<4x8x8xf32> to vector<4x8x8xbf16>
    %53 = vector.shape_cast %46 : vector<8x32xf32> to vector<8x4x8xf32>
    %54 = tpu.transpose %53, [1, 0, 2] : vector<8x4x8xf32> -> vector<4x8x8xf32>
    %55 = arith.truncf %54 : vector<4x8x8xf32> to vector<4x8x8xbf16>
    "tpu.trace_start"() <{level = 10 : i32, message = "hqd,hkd->hqk"}> : () -> ()
    %cst_23 = arith.constant dense<0.000000e+00> : vector<4x8x8xf32>
    %56 = tpu.matmul %49, %52, %cst_23 {dimension_numbers = #tpu.dot_dimension_numbers<[2], [2], [1], [1], [0, 0, 0, 1, 1, 1], [0], [0]>} : vector<4x8x8xbf16>, vector<4x8x8xbf16>, vector<4x8x8xf32> -> vector<4x8x8xf32>
    "tpu.trace_stop"() : () -> ()
    %57 = vector.shape_cast %7 : vector<8x8xf32> to vector<1x8x8xf32>
    %58 = vector.broadcast %57 : vector<1x8x8xf32> to vector<4x8x8xf32>
    %59 = arith.addf %56, %58 : vector<4x8x8xf32>
    %cst_24 = arith.constant dense<0xFF800000> : vector<4x8xf32>
    %60 = vector.multi_reduction <maximumf>, %59, %cst_24 [2] : vector<4x8x8xf32> to vector<4x8xf32>
    %61 = vector.shape_cast %60 : vector<4x8xf32> to vector<4x8x1xf32>
    %62 = vector.broadcast %61 : vector<4x8x1xf32> to vector<4x8x8xf32>
    %63 = arith.subf %59, %62 : vector<4x8x8xf32>
    %64 = math.exp %63 : vector<4x8x8xf32>
    %cst_25 = arith.constant dense<0.000000e+00> : vector<4x8xf32>
    %65 = vector.multi_reduction <add>, %64, %cst_25 [2] : vector<4x8x8xf32> to vector<4x8xf32>
    %66 = vector.shape_cast %65 : vector<4x8xf32> to vector<4x8x1xf32>
    %67 = tpu.reciprocal %66 {approx = true} : vector<4x8x1xf32> -> vector<4x8x1xf32>
    %68 = vector.broadcast %67 : vector<4x8x1xf32> to vector<4x8x8xf32>
    %69 = arith.mulf %64, %68 : vector<4x8x8xf32>
    %70 = arith.truncf %69 : vector<4x8x8xf32> to vector<4x8x8xbf16>
    "tpu.trace_start"() <{level = 10 : i32, message = "hqk,hkd->hqd"}> : () -> ()
    %cst_26 = arith.constant dense<0.000000e+00> : vector<4x8x8xf32>
    %71 = tpu.matmul %70, %55, %cst_26 {dimension_numbers = #tpu.dot_dimension_numbers<[2], [1], [1], [2], [0, 0, 0, 1, 1, 2], [0], [0]>} : vector<4x8x8xbf16>, vector<4x8x8xbf16>, vector<4x8x8xf32> -> vector<4x8x8xf32>
    "tpu.trace_stop"() : () -> ()
    %72 = tpu.transpose %71, [1, 0, 2] : vector<4x8x8xf32> -> vector<8x4x8xf32>
    %73 = vector.shape_cast %72 : vector<8x4x8xf32> to vector<8x32xf32>
    %74 = arith.truncf %73 : vector<8x32xf32> to vector<8x32xbf16>
    %c0_27 = arith.constant 0 : index
    %c0_28 = arith.constant 0 : index
    %c0_29 = arith.constant 0 : index
    %75 = vector.load %arg8[%c0_27, %c0_28, %c0_29] : memref<1x32x32xbf16, #tpu.memory_space<vmem>>, vector<1x32x32xbf16>
    %76 = vector.shape_cast %75 : vector<1x32x32xbf16> to vector<32x32xbf16>
    %cst_30 = arith.constant dense<0.000000e+00> : vector<8x32xf32>
    %77 = tpu.matmul %74, %76, %cst_30 {dimension_numbers = #tpu.dot_dimension_numbers<[1], [0], [0], [1], [0, 0, 1, 1], [], []>} : vector<8x32xbf16>, vector<32x32xbf16>, vector<8x32xf32> -> vector<8x32xf32>
    %c0_31 = arith.constant 0 : index
    %c0_32 = arith.constant 0 : index
    %c0_33 = arith.constant 0 : index
    %78 = vector.load %arg9[%c0_31, %c0_32, %c0_33] : memref<1x1x32xf32, #tpu.memory_space<vmem>>, vector<1x1x32xf32>
    %79 = vector.shape_cast %78 : vector<1x1x32xf32> to vector<1x32xf32>
    %80 = vector.broadcast %79 : vector<1x32xf32> to vector<8x32xf32>
    %81 = arith.addf %77, %80 : vector<8x32xf32>
    %82 = arith.addf %3, %81 : vector<8x32xf32>
    %c0_34 = arith.constant 0 : index
    %c0_35 = arith.constant 0 : index
    %c0_36 = arith.constant 0 : index
    %83 = vector.load %arg10[%c0_34, %c0_35, %c0_36] : memref<1x1x32xf32, #tpu.memory_space<vmem>>, vector<1x1x32xf32>
    %84 = vector.shape_cast %83 : vector<1x1x32xf32> to vector<1x32xf32>
    %c0_37 = arith.constant 0 : index
    %c0_38 = arith.constant 0 : index
    %c0_39 = arith.constant 0 : index
    %85 = vector.load %arg11[%c0_37, %c0_38, %c0_39] : memref<1x1x32xf32, #tpu.memory_space<vmem>>, vector<1x1x32xf32>
    %86 = vector.shape_cast %85 : vector<1x1x32xf32> to vector<1x32xf32>
    %cst_40 = arith.constant dense<0.000000e+00> : vector<8xf32>
    %87 = vector.multi_reduction <add>, %82, %cst_40 [1] : vector<8x32xf32> to vector<8xf32>
    %88 = vector.shape_cast %87 : vector<8xf32> to vector<8x1xf32>
    %cst_41 = arith.constant 3.200000e+01 : f32
    %89 = vector.broadcast %cst_41 : f32 to vector<8x1xf32>
    %90 = arith.divf %88, %89 : vector<8x1xf32>
    %91 = vector.broadcast %90 : vector<8x1xf32> to vector<8x32xf32>
    %92 = arith.subf %82, %91 : vector<8x32xf32>
    %93 = arith.mulf %92, %92 : vector<8x32xf32>
    %cst_42 = arith.constant dense<0.000000e+00> : vector<8xf32>
    %94 = vector.multi_reduction <add>, %93, %cst_42 [1] : vector<8x32xf32> to vector<8xf32>
    %95 = vector.shape_cast %94 : vector<8xf32> to vector<8x1xf32>
    %cst_43 = arith.constant 3.200000e+01 : f32
    %96 = vector.broadcast %cst_43 : f32 to vector<8x1xf32>
    %97 = arith.divf %95, %96 : vector<8x1xf32>
    %98 = vector.broadcast %90 : vector<8x1xf32> to vector<8x32xf32>
    %99 = arith.subf %82, %98 : vector<8x32xf32>
    %cst_44 = arith.constant 9.99999974E-6 : f32
    %100 = vector.broadcast %cst_44 : f32 to vector<8x1xf32>
    %101 = arith.addf %97, %100 : vector<8x1xf32>
    %102 = math.rsqrt %101 : vector<8x1xf32>
    %103 = vector.broadcast %102 : vector<8x1xf32> to vector<8x32xf32>
    %104 = arith.mulf %99, %103 : vector<8x32xf32>
    %105 = vector.broadcast %84 : vector<1x32xf32> to vector<8x32xf32>
    %106 = arith.mulf %104, %105 : vector<8x32xf32>
    %107 = vector.broadcast %86 : vector<1x32xf32> to vector<8x32xf32>
    %108 = arith.addf %106, %107 : vector<8x32xf32>
    %109 = arith.truncf %108 : vector<8x32xf32> to vector<8x32xbf16>
    %c0_45 = arith.constant 0 : index
    %c0_46 = arith.constant 0 : index
    %c0_47 = arith.constant 0 : index
    %110 = vector.load %arg12[%c0_45, %c0_46, %c0_47] : memref<1x32x64xbf16, #tpu.memory_space<vmem>>, vector<1x32x64xbf16>
    %111 = vector.shape_cast %110 : vector<1x32x64xbf16> to vector<32x64xbf16>
    %cst_48 = arith.constant dense<0.000000e+00> : vector<8x64xf32>
    %112 = tpu.matmul %109, %111, %cst_48 {dimension_numbers = #tpu.dot_dimension_numbers<[1], [0], [0], [1], [0, 0, 1, 1], [], []>} : vector<8x32xbf16>, vector<32x64xbf16>, vector<8x64xf32> -> vector<8x64xf32>
    %c0_49 = arith.constant 0 : index
    %c0_50 = arith.constant 0 : index
    %c0_51 = arith.constant 0 : index
    %113 = vector.load %arg13[%c0_49, %c0_50, %c0_51] : memref<1x1x64xf32, #tpu.memory_space<vmem>>, vector<1x1x64xf32>
    %114 = vector.shape_cast %113 : vector<1x1x64xf32> to vector<1x64xf32>
    %115 = vector.broadcast %114 : vector<1x64xf32> to vector<8x64xf32>
    %116 = arith.addf %112, %115 : vector<8x64xf32>
    %117 = arith.mulf %116, %116 : vector<8x64xf32>
    %118 = arith.mulf %116, %117 : vector<8x64xf32>
    %cst_52 = arith.constant 4.471500e-02 : f32
    %119 = vector.broadcast %cst_52 : f32 to vector<8x64xf32>
    %120 = arith.mulf %119, %118 : vector<8x64xf32>
    %121 = arith.addf %116, %120 : vector<8x64xf32>
    %cst_53 = arith.constant 0.797884583 : f32
    %122 = vector.broadcast %cst_53 : f32 to vector<8x64xf32>
    %123 = arith.mulf %122, %121 : vector<8x64xf32>
    %124 = math.tanh %123 : vector<8x64xf32>
    %cst_54 = arith.constant 1.000000e+00 : f32
    %125 = vector.broadcast %cst_54 : f32 to vector<8x64xf32>
    %126 = arith.addf %125, %124 : vector<8x64xf32>
    %cst_55 = arith.constant 5.000000e-01 : f32
    %127 = vector.broadcast %cst_55 : f32 to vector<8x64xf32>
    %128 = arith.mulf %127, %126 : vector<8x64xf32>
    %129 = arith.mulf %116, %128 : vector<8x64xf32>
    %130 = arith.truncf %129 : vector<8x64xf32> to vector<8x64xbf16>
    %c0_56 = arith.constant 0 : index
    %c0_57 = arith.constant 0 : index
    %c0_58 = arith.constant 0 : index
    %131 = vector.load %arg14[%c0_56, %c0_57, %c0_58] : memref<1x64x32xbf16, #tpu.memory_space<vmem>>, vector<1x64x32xbf16>
    %132 = vector.shape_cast %131 : vector<1x64x32xbf16> to vector<64x32xbf16>
    %cst_59 = arith.constant dense<0.000000e+00> : vector<8x32xf32>
    %133 = tpu.matmul %130, %132, %cst_59 {dimension_numbers = #tpu.dot_dimension_numbers<[1], [0], [0], [1], [0, 0, 1, 1], [], []>} : vector<8x64xbf16>, vector<64x32xbf16>, vector<8x32xf32> -> vector<8x32xf32>
    %c0_60 = arith.constant 0 : index
    %c0_61 = arith.constant 0 : index
    %c0_62 = arith.constant 0 : index
    %134 = vector.load %arg15[%c0_60, %c0_61, %c0_62] : memref<1x1x32xf32, #tpu.memory_space<vmem>>, vector<1x1x32xf32>
    %135 = vector.shape_cast %134 : vector<1x1x32xf32> to vector<1x32xf32>
    %136 = vector.broadcast %135 : vector<1x32xf32> to vector<8x32xf32>
    %137 = arith.addf %133, %136 : vector<8x32xf32>
    %138 = arith.addf %82, %137 : vector<8x32xf32>
    %c0_63 = arith.constant 0 : index
    %c0_64 = arith.constant 0 : index
    %139 = vector.load %arg17[%c0_63, %c0_64] : memref<8x32xf32, #tpu.memory_space<vmem>>, vector<8x32xf32>
    tpu.vector_store %arg17[%c0_63, %c0_64], %138 {strides = array<i32>} : memref<8x32xf32, #tpu.memory_space<vmem>>, vector<8x32xf32>,
    %c1_i32 = arith.constant 1 : i32
    %140 = arith.cmpi eq, %arg1, %c1_i32 : i32
    %141 = arith.extui %140 : i1 to i32
    %c0_i32_65 = arith.constant 0 : i32
    %142 = arith.cmpi ne, %141, %c0_i32_65 : i32
    scf.if %142 {
      %c0_66 = arith.constant 0 : index
      %c0_67 = arith.constant 0 : index
      %c0_68 = arith.constant 0 : index
      %143 = vector.load %arg16[%c0_66, %c0_67, %c0_68] : memref<1x8x32xf32, #tpu.memory_space<vmem>>, vector<1x8x32xf32>
      %144 = vector.shape_cast %143 : vector<1x8x32xf32> to vector<8x32xf32>
      %145 = vector.shape_cast %138 : vector<8x32xf32> to vector<1x8x32xf32>
      tpu.vector_store %arg16[%c0_66, %c0_67, %c0_68], %145 {strides = array<i32>} : memref<1x8x32xf32, #tpu.memory_space<vmem>>, vector<1x8x32xf32>,
    } else {
    }
    return
  }
  func.func @transform_0(%arg0: i32, %arg1: i32) -> (i32, i32, i32) {
    %c0_i32 = arith.constant 0 : i32
    %c0_i32_0 = arith.constant 0 : i32
    %c0_i32_1 = arith.constant 0 : i32
    return %arg0, %c0_i32, %c0_i32_0 : i32, i32, i32
  }
  func.func @transform_1(%arg0: i32, %arg1: i32) -> (i32, i32, i32) {
    %c0_i32 = arith.constant 0 : i32
    %c0_i32_0 = arith.constant 0 : i32
    %c0_i32_1 = arith.constant 0 : i32
    return %arg0, %c0_i32, %c0_i32_0 : i32, i32, i32
  }
  func.func @transform_2(%arg0: i32, %arg1: i32) -> (i32, i32, i32) {
    %c0_i32 = arith.constant 0 : i32
    %c0_i32_0 = arith.constant 0 : i32
    %c0_i32_1 = arith.constant 0 : i32
    return %arg1, %c0_i32, %c0_i32_0 : i32, i32, i32
  }
  func.func @transform_3(%arg0: i32, %arg1: i32) -> (i32, i32, i32) {
    %c0_i32 = arith.constant 0 : i32
    %c0_i32_0 = arith.constant 0 : i32
    %c0_i32_1 = arith.constant 0 : i32
    return %arg1, %c0_i32, %c0_i32_0 : i32, i32, i32
  }
  func.func @transform_4(%arg0: i32, %arg1: i32) -> (i32, i32, i32) {
    %c0_i32 = arith.constant 0 : i32
    %c0_i32_0 = arith.constant 0 : i32
    %c0_i32_1 = arith.constant 0 : i32
    return %arg1, %c0_i32, %c0_i32_0 : i32, i32, i32
  }
  func.func @transform_5(%arg0: i32, %arg1: i32) -> (i32, i32, i32) {
    %c0_i32 = arith.constant 0 : i32
    %c0_i32_0 = arith.constant 0 : i32
    %c0_i32_1 = arith.constant 0 : i32
    return %arg1, %c0_i32, %c0_i32_0 : i32, i32, i32
  }
  func.func @transform_6(%arg0: i32, %arg1: i32) -> (i32, i32, i32) {
    %c0_i32 = arith.constant 0 : i32
    %c0_i32_0 = arith.constant 0 : i32
    %c0_i32_1 = arith.constant 0 : i32
    return %arg1, %c0_i32, %c0_i32_0 : i32, i32, i32
  }
  func.func @transform_7(%arg0: i32, %arg1: i32) -> (i32, i32, i32) {
    %c0_i32 = arith.constant 0 : i32
    %c0_i32_0 = arith.constant 0 : i32
    %c0_i32_1 = arith.constant 0 : i32
    return %arg1, %c0_i32, %c0_i32_0 : i32, i32, i32
  }
  func.func @transform_8(%arg0: i32, %arg1: i32) -> (i32, i32, i32) {
    %c0_i32 = arith.constant 0 : i32
    %c0_i32_0 = arith.constant 0 : i32
    %c0_i32_1 = arith.constant 0 : i32
    return %arg1, %c0_i32, %c0_i32_0 : i32, i32, i32
  }
  func.func @transform_9(%arg0: i32, %arg1: i32) -> (i32, i32, i32) {
    %c0_i32 = arith.constant 0 : i32
    %c0_i32_0 = arith.constant 0 : i32
    %c0_i32_1 = arith.constant 0 : i32
    return %arg1, %c0_i32, %c0_i32_0 : i32, i32, i32
  }
  func.func @transform_10(%arg0: i32, %arg1: i32) -> (i32, i32, i32) {
    %c0_i32 = arith.constant 0 : i32
    %c0_i32_0 = arith.constant 0 : i32
    %c0_i32_1 = arith.constant 0 : i32
    return %arg1, %c0_i32, %c0_i32_0 : i32, i32, i32
  }
  func.func @transform_11(%arg0: i32, %arg1: i32) -> (i32, i32, i32) {
    %c0_i32 = arith.constant 0 : i32
    %c0_i32_0 = arith.constant 0 : i32
    %c0_i32_1 = arith.constant 0 : i32
    return %arg1, %c0_i32, %c0_i32_0 : i32, i32, i32
  }
  func.func @transform_12(%arg0: i32, %arg1: i32) -> (i32, i32, i32) {
    %c0_i32 = arith.constant 0 : i32
    %c0_i32_0 = arith.constant 0 : i32
    %c0_i32_1 = arith.constant 0 : i32
    return %arg1, %c0_i32, %c0_i32_0 : i32, i32, i32
  }
  func.func @transform_13(%arg0: i32, %arg1: i32) -> (i32, i32, i32) {
    %c0_i32 = arith.constant 0 : i32
    %c0_i32_0 = arith.constant 0 : i32
    %c0_i32_1 = arith.constant 0 : i32
    return %arg1, %c0_i32, %c0_i32_0 : i32, i32, i32
  }
  func.func @transform_14(%arg0: i32, %arg1: i32) -> (i32, i32, i32) {
    %c0_i32 = arith.constant 0 : i32
    %c0_i32_0 = arith.constant 0 : i32
    %c0_i32_1 = arith.constant 0 : i32
    return %arg0, %c0_i32, %c0_i32_0 : i32, i32, i32
  }
}

</mosaic_0001>

<llo_original>
// kernel: tpu_custom_call.1
$region0: #{tpu_custom_call.1}
  #allocation0 [shape = 'u32[]', space=smem, size = 0x4, offset = 0x4, fixed_abs, tag = 'smem constant byte address 0x4 - core index']
  #allocation1 [shape = 'u32[144,128]{1,0:T(1,128)}', space=vmem, size = 0x12000, scoped, tag = 'internal scratch']
  #allocation2 [shape = 'f32[8,32]{1,0:T(8,128)}', space=vmem, size = 0x1000, scoped, tag = 'scratch operand']
  %s0 = inlined_call_operand.hbm [shape: f32[2,8,32], index: 0, kind: input, shape index: {}]
  %s1 = inlined_call_operand.vmem [shape: f32[2,1,8], index: 1, kind: input, shape index: {}]
  %s2 = inlined_call_operand.vmem [shape: f32[2,1,32], index: 2, kind: input, shape index: {}]
  %s3 = inlined_call_operand.vmem [shape: f32[2,1,32], index: 3, kind: input, shape index: {}]
  %s4 = inlined_call_operand.vmem [shape: bf16[2,32,96], index: 4, kind: input, shape index: {}]
  %s5 = inlined_call_operand.vmem [shape: f32[2,1,96], index: 5, kind: input, shape index: {}]
  %s6 = inlined_call_operand.vmem [shape: bf16[2,32,32], index: 6, kind: input, shape index: {}]
  %s7 = inlined_call_operand.vmem [shape: f32[2,1,32], index: 7, kind: input, shape index: {}]
  %s8 = inlined_call_operand.vmem [shape: f32[2,1,32], index: 8, kind: input, shape index: {}]
  %s9 = inlined_call_operand.hbm [shape: f32[2,1,32], index: 9, kind: input, shape index: {}]
  %s10 = inlined_call_operand.vmem [shape: bf16[2,32,64], index: 10, kind: input, shape index: {}]
  %s11 = inlined_call_operand.hbm [shape: f32[2,1,64], index: 11, kind: input, shape index: {}]
  %s12 = inlined_call_operand.vmem [shape: bf16[2,64,32], index: 12, kind: input, shape index: {}]
  %s13 = inlined_call_operand.vmem [shape: f32[2,1,32], index: 13, kind: input, shape index: {}]
  %s14 = inlined_call_operand.hbm [shape: f32[2,8,32], index: 14, kind: output, shape index: {}]
  %s15 = sld [smem:[#allocation0]]
  $region109: #{tpu_custom_call.1} parent=0
    _
  %s17 = ssub.s32 1, %s15
  %s18 = scalar_select 0, %s17, %s15
  $region1: #{tpu_custom_call.1} parent=0
    #allocation3 [shape = 'u8[8192]{0}', space=vmem, size = 0x2000, scoped, tag = 'input window, operand 0']
    #allocation4 [shape = 's32[2]{0}', space=sflag, size = 0x8, scoped, tag = 'scoped memory for tpu_custom_call.1']
    #allocation5 [shape = 's32[2]{0}', space=sflag, size = 0x8, scoped, tag = 'scoped memory for tpu_custom_call.1']
    #allocation6 [shape = 'u8[1024]{0}', space=vmem, size = 0x400, scoped, tag = 'input window, operand 9']
    #allocation7 [shape = 's32[2]{0}', space=sflag, size = 0x8, scoped, tag = 'scoped memory for tpu_custom_call.1']
    #allocation8 [shape = 'u8[1024]{0}', space=vmem, size = 0x400, scoped, tag = 'input window, operand 11']
    #allocation9 [shape = 'u8[8192]{0}', space=vmem, size = 0x2000, scoped, tag = 'output window, operand 0']
    %19 = vsyncpa [#allocation4], 0
    %s20 = scalar_lea.sflag [#allocation4], 1
    %21 = vsyncpa %s20, 0
    %22 = vsyncpa [#allocation7], 0
    %s23 = scalar_lea.sflag [#allocation7], 1
    %24 = vsyncpa %s23, 0
    %25 = vsyncpa [#allocation5], 0
    %s26 = scalar_lea.sflag [#allocation5], 1
    %27 = vsyncpa %s26, 0
    loop: start=0, step=1, limit=6
    $region2: #{tpu_custom_call.1} parent=1 // loop_pre_header
      _
    $region3: #{tpu_custom_call.1} parent=1 // loop_header
      %s29 = sphi 0, %s33
      %p30 = scmp.ge.s32.totalorder %s29, 6
      %s36 = sphi 0, %s48
      %s37 = sphi 0, %s44
      %s38 = sphi 0, %s36
      %s39 = sphi 0, %s37
      %s40 = sphi 0, %s38
      %s41 = sphi 0, %s39
      %s51 = sphi 0, %s53
      %s54 = sphi 0, %s51
      %s55 = sphi 0, %s54
      %s71 = sphi 0, %s55
      %s77 = sphi 0, %s79
      %s80 = sphi 0, %s77
      %s81 = sphi 0, %s80
      %s97 = sphi 0, %s81
      %s103 = sphi 0, %s105
      %s106 = sphi 0, %s103
      %s107 = sphi 0, %s106
      %s123 = sphi 0, %s107
      %s129 = sphi 0, %s131
      %s132 = sphi 0, %s129
      %s133 = sphi 0, %s132
      %s149 = sphi 0, %s133
      %s155 = sphi 0, %s157
      %s158 = sphi 0, %s155
      %s159 = sphi 0, %s158
      %s175 = sphi 0, %s159
      %s181 = sphi 0, %s183
      %s184 = sphi 0, %s181
      %s185 = sphi 0, %s184
      %s201 = sphi 0, %s185
      %s207 = sphi 0, %s209
      %s210 = sphi 0, %s207
      %s211 = sphi 0, %s210
      %s227 = sphi 0, %s211
      %s233 = sphi 0, %s235
      %s236 = sphi 0, %s233
      %s237 = sphi 0, %s236
      %s253 = sphi 0, %s237
      %s259 = sphi 0, %s261
      %s262 = sphi 0, %s259
      %s263 = sphi 0, %s262
      %s279 = sphi 0, %s263
      %s285 = sphi 0, %s287
      %s288 = sphi 0, %s285
      %s289 = sphi 0, %s288
      %s305 = sphi 0, %s289
      %s311 = sphi 0, %s313
      %s314 = sphi 0, %s311
      %s315 = sphi 0, %s314
      %s331 = sphi 0, %s315
      %s337 = sphi 0, %s339
      %s340 = sphi 0, %s337
      %s341 = sphi 0, %s340
      %s357 = sphi 0, %s341
      %s363 = sphi 0, %s365
      %s366 = sphi 0, %s363
      %s367 = sphi 0, %s366
      %s383 = sphi 0, %s367
      %s389 = sphi 0, %s391
      %s392 = sphi 0, %s389
      %s393 = sphi 0, %s392
      %s409 = sphi 0, %s393
      %s415 = sphi 0, %s417
      %s418 = sphi 0, %s415
      %s419 = sphi 0, %s418
      %s435 = sphi 0, %s419
    $region4: #{tpu_custom_call.1} parent=1 // loop_header_branch
      %32 = sbr.rel (%p30) target = $region8
    $region5: #{tpu_custom_call.1} parent=1 // loop_body
      %s34 = ssub.s32 %s29, 1
      %s35 = ssub.s32 %s29, 2
      %s42 = sadd.s32 1, %s37
      %p43 = scmp.ge.s32.totalorder %s42, 2
      %s44 = scalar_select %p43, 0, %s42
      %s45 = sadd.s32 1, %s36
      %s46 = scalar_select %p43, %s45, %s36
      %p47 = scmp.ge.s32.totalorder %s46, 2
      %s48 = scalar_select %p47, 0, %s46
      %s49 = ssub.s32 %s36, %s48
      %p50 = scmp.eq.s32.totalorder %s49, 0
      %s52 = sadd.s32 %s51, 1
      %s53 = scalar_select %p50, %s51, %s52
      %p56 = pneg %p50
      %p57 = scmp.eq.s32.totalorder %s29, 3
      %p58 = por %p56, %p57
      %p59 = scmp.ne.s32.totalorder %s51, %s54
      %p60 = scmp.eq.s32.totalorder %s29, 0
      %p61 = por %p59, %p60
      %p62 = scmp.ne.s32.totalorder %s51, %s54
      %p63 = scmp.eq.s32.totalorder %s34, 3
      %p64 = por %p62, %p63
      %p65 = scmp.ne.s32.totalorder %s54, %s55
      %p66 = scmp.eq.s32.totalorder %s34, 0
      %p67 = por %p65, %p66
      %p68 = scmp.ne.s32.totalorder %s54, %s55
      %p69 = scmp.eq.s32.totalorder %s35, 3
      %p70 = por %p68, %p69
      %p72 = scmp.ne.s32.totalorder %s55, %s71
      %p73 = scmp.eq.s32.totalorder %s35, 0
      %p74 = por %p72, %p73
      %s75 = ssub.s32 %s36, %s48
      %p76 = scmp.eq.s32.totalorder %s75, 0
      %s78 = sadd.s32 %s77, 1
      %s79 = scalar_select %p76, %s77, %s78
      %p82 = pneg %p76
      %p83 = scmp.eq.s32.totalorder %s29, 3
      %p84 = por %p82, %p83
      %p85 = scmp.ne.s32.totalorder %s77, %s80
      %p86 = scmp.eq.s32.totalorder %s29, 0
      %p87 = por %p85, %p86
      %p88 = scmp.ne.s32.totalorder %s77, %s80
      %p89 = scmp.eq.s32.totalorder %s34, 3
      %p90 = por %p88, %p89
      %p91 = scmp.ne.s32.totalorder %s80, %s81
      %p92 = scmp.eq.s32.totalorder %s34, 0
      %p93 = por %p91, %p92
      %p94 = scmp.ne.s32.totalorder %s80, %s81
      %p95 = scmp.eq.s32.totalorder %s35, 3
      %p96 = por %p94, %p95
      %p98 = scmp.ne.s32.totalorder %s81, %s97
      %p99 = scmp.eq.s32.totalorder %s35, 0
      %p100 = por %p98, %p99
      %s101 = ssub.s32 %s37, %s44
      %p102 = scmp.eq.s32.totalorder %s101, 0
      %s104 = sadd.s32 %s103, 1
      %s105 = scalar_select %p102, %s103, %s104
      %p108 = pneg %p102
      %p109 = scmp.eq.s32.totalorder %s29, 3
      %p110 = por %p108, %p109
      %p111 = scmp.ne.s32.totalorder %s103, %s106
      %p112 = scmp.eq.s32.totalorder %s29, 0
      %p113 = por %p111, %p112
      %p114 = scmp.ne.s32.totalorder %s103, %s106
      %p115 = scmp.eq.s32.totalorder %s34, 3
      %p116 = por %p114, %p115
      %p117 = scmp.ne.s32.totalorder %s106, %s107
      %p118 = scmp.eq.s32.totalorder %s34, 0
      %p119 = por %p117, %p118
      %p120 = scmp.ne.s32.totalorder %s106, %s107
      %p121 = scmp.eq.s32.totalorder %s35, 3
      %p122 = por %p120, %p121
      %p124 = scmp.ne.s32.totalorder %s107, %s123
      %p125 = scmp.eq.s32.totalorder %s35, 0
      %p126 = por %p124, %p125
      %s127 = ssub.s32 %s37, %s44
      %p128 = scmp.eq.s32.totalorder %s127, 0
      %s130 = sadd.s32 %s129, 1
      %s131 = scalar_select %p128, %s129, %s130
      %p134 = pneg %p128
      %p135 = scmp.eq.s32.totalorder %s29, 3
      %p136 = por %p134, %p135
      %p137 = scmp.ne.s32.totalorder %s129, %s132
      %p138 = scmp.eq.s32.totalorder %s29, 0
      %p139 = por %p137, %p138
      %p140 = scmp.ne.s32.totalorder %s129, %s132
      %p141 = scmp.eq.s32.totalorder %s34, 3
      %p142 = por %p140, %p141
      %p143 = scmp.ne.s32.totalorder %s132, %s133
      %p144 = scmp.eq.s32.totalorder %s34, 0
      %p145 = por %p143, %p144
      %p146 = scmp.ne.s32.totalorder %s132, %s133
      %p147 = scmp.eq.s32.totalorder %s35, 3
      %p148 = por %p146, %p147
      %p150 = scmp.ne.s32.totalorder %s133, %s149
      %p151 = scmp.eq.s32.totalorder %s35, 0
      %p152 = por %p150, %p151
      %s153 = ssub.s32 %s37, %s44
      %p154 = scmp.eq.s32.totalorder %s153, 0
      %s156 = sadd.s32 %s155, 1
      %s157 = scalar_select %p154, %s155, %s156
      %p160 = pneg %p154
      %p161 = scmp.eq.s32.totalorder %s29, 3
      %p162 = por %p160, %p161
      %p163 = scmp.ne.s32.totalorder %s155, %s158
      %p164 = scmp.eq.s32.totalorder %s29, 0
      %p165 = por %p163, %p164
      %p166 = scmp.ne.s32.totalorder %s155, %s158
      %p167 = scmp.eq.s32.totalorder %s34, 3
      %p168 = por %p166, %p167
      %p169 = scmp.ne.s32.totalorder %s158, %s159
      %p170 = scmp.eq.s32.totalorder %s34, 0
      %p171 = por %p169, %p170
      %p172 = scmp.ne.s32.totalorder %s158, %s159
      %p173 = scmp.eq.s32.totalorder %s35, 3
      %p174 = por %p172, %p173
      %p176 = scmp.ne.s32.totalorder %s159, %s175
      %p177 = scmp.eq.s32.totalorder %s35, 0
      %p178 = por %p176, %p177
      %s179 = ssub.s32 %s37, %s44
      %p180 = scmp.eq.s32.totalorder %s179, 0
      %s182 = sadd.s32 %s181, 1
      %s183 = scalar_select %p180, %s181, %s182
      %p186 = pneg %p180
      %p187 = scmp.eq.s32.totalorder %s29, 3
      %p188 = por %p186, %p187
      %p189 = scmp.ne.s32.totalorder %s181, %s184
      %p190 = scmp.eq.s32.totalorder %s29, 0
      %p191 = por %p189, %p190
      %p192 = scmp.ne.s32.totalorder %s181, %s184
      %p193 = scmp.eq.s32.totalorder %s34, 3
      %p194 = por %p192, %p193
      %p195 = scmp.ne.s32.totalorder %s184, %s185
      %p196 = scmp.eq.s32.totalorder %s34, 0
      %p197 = por %p195, %p196
      %p198 = scmp.ne.s32.totalorder %s184, %s185
      %p199 = scmp.eq.s32.totalorder %s35, 3
      %p200 = por %p198, %p199
      %p202 = scmp.ne.s32.totalorder %s185, %s201
      %p203 = scmp.eq.s32.totalorder %s35, 0
      %p204 = por %p202, %p203
      %s205 = ssub.s32 %s37, %s44
      %p206 = scmp.eq.s32.totalorder %s205, 0
      %s208 = sadd.s32 %s207, 1
      %s209 = scalar_select %p206, %s207, %s208
      %p212 = pneg %p206
      %p213 = scmp.eq.s32.totalorder %s29, 3
      %p214 = por %p212, %p213
      %p215 = scmp.ne.s32.totalorder %s207, %s210
      %p216 = scmp.eq.s32.totalorder %s29, 0
      %p217 = por %p215, %p216
      %p218 = scmp.ne.s32.totalorder %s207, %s210
      %p219 = scmp.eq.s32.totalorder %s34, 3
      %p220 = por %p218, %p219
      %p221 = scmp.ne.s32.totalorder %s210, %s211
      %p222 = scmp.eq.s32.totalorder %s34, 0
      %p223 = por %p221, %p222
      %p224 = scmp.ne.s32.totalorder %s210, %s211
      %p225 = scmp.eq.s32.totalorder %s35, 3
      %p226 = por %p224, %p225
      %p228 = scmp.ne.s32.totalorder %s211, %s227
      %p229 = scmp.eq.s32.totalorder %s35, 0
      %p230 = por %p228, %p229
      %s231 = ssub.s32 %s37, %s44
      %p232 = scmp.eq.s32.totalorder %s231, 0
      %s234 = sadd.s32 %s233, 1
      %s235 = scalar_select %p232, %s233, %s234
      %p238 = pneg %p232
      %p239 = scmp.eq.s32.totalorder %s29, 3
      %p240 = por %p238, %p239
      %p241 = scmp.ne.s32.totalorder %s233, %s236
      %p242 = scmp.eq.s32.totalorder %s29, 0
      %p243 = por %p241, %p242
      %p244 = scmp.ne.s32.totalorder %s233, %s236
      %p245 = scmp.eq.s32.totalorder %s34, 3
      %p246 = por %p244, %p245
      %p247 = scmp.ne.s32.totalorder %s236, %s237
      %p248 = scmp.eq.s32.totalorder %s34, 0
      %p249 = por %p247, %p248
      %p250 = scmp.ne.s32.totalorder %s236, %s237
      %p251 = scmp.eq.s32.totalorder %s35, 3
      %p252 = por %p250, %p251
      %p254 = scmp.ne.s32.totalorder %s237, %s253
      %p255 = scmp.eq.s32.totalorder %s35, 0
      %p256 = por %p254, %p255
      %s257 = ssub.s32 %s37, %s44
      %p258 = scmp.eq.s32.totalorder %s257, 0
      %s260 = sadd.s32 %s259, 1
      %s261 = scalar_select %p258, %s259, %s260
      %p264 = pneg %p258
      %p265 = scmp.eq.s32.totalorder %s29, 3
      %p266 = por %p264, %p265
      %p267 = scmp.ne.s32.totalorder %s259, %s262
      %p268 = scmp.eq.s32.totalorder %s29, 0
      %p269 = por %p267, %p268
      %p270 = scmp.ne.s32.totalorder %s259, %s262
      %p271 = scmp.eq.s32.totalorder %s34, 3
      %p272 = por %p270, %p271
      %p273 = scmp.ne.s32.totalorder %s262, %s263
      %p274 = scmp.eq.s32.totalorder %s34, 0
      %p275 = por %p273, %p274
      %p276 = scmp.ne.s32.totalorder %s262, %s263
      %p277 = scmp.eq.s32.totalorder %s35, 3
      %p278 = por %p276, %p277
      %p280 = scmp.ne.s32.totalorder %s263, %s279
      %p281 = scmp.eq.s32.totalorder %s35, 0
      %p282 = por %p280, %p281
      %s283 = ssub.s32 %s37, %s44
      %p284 = scmp.eq.s32.totalorder %s283, 0
      %s286 = sadd.s32 %s285, 1
      %s287 = scalar_select %p284, %s285, %s286
      %p290 = pneg %p284
      %p291 = scmp.eq.s32.totalorder %s29, 3
      %p292 = por %p290, %p291
      %p293 = scmp.ne.s32.totalorder %s285, %s288
      %p294 = scmp.eq.s32.totalorder %s29, 0
      %p295 = por %p293, %p294
      %p296 = scmp.ne.s32.totalorder %s285, %s288
      %p297 = scmp.eq.s32.totalorder %s34, 3
      %p298 = por %p296, %p297
      %p299 = scmp.ne.s32.totalorder %s288, %s289
      %p300 = scmp.eq.s32.totalorder %s34, 0
      %p301 = por %p299, %p300
      %p302 = scmp.ne.s32.totalorder %s288, %s289
      %p303 = scmp.eq.s32.totalorder %s35, 3
      %p304 = por %p302, %p303
      %p306 = scmp.ne.s32.totalorder %s289, %s305
      %p307 = scmp.eq.s32.totalorder %s35, 0
      %p308 = por %p306, %p307
      %s309 = ssub.s32 %s37, %s44
      %p310 = scmp.eq.s32.totalorder %s309, 0
      %s312 = sadd.s32 %s311, 1
      %s313 = scalar_select %p310, %s311, %s312
      %p316 = pneg %p310
      %p317 = scmp.eq.s32.totalorder %s29, 3
      %p318 = por %p316, %p317
      %p319 = scmp.ne.s32.totalorder %s311, %s314
      %p320 = scmp.eq.s32.totalorder %s29, 0
      %p321 = por %p319, %p320
      %p322 = scmp.ne.s32.totalorder %s311, %s314
      %p323 = scmp.eq.s32.totalorder %s34, 3
      %p324 = por %p322, %p323
      %p325 = scmp.ne.s32.totalorder %s314, %s315
      %p326 = scmp.eq.s32.totalorder %s34, 0
      %p327 = por %p325, %p326
      %p328 = scmp.ne.s32.totalorder %s314, %s315
      %p329 = scmp.eq.s32.totalorder %s35, 3
      %p330 = por %p328, %p329
      %p332 = scmp.ne.s32.totalorder %s315, %s331
      %p333 = scmp.eq.s32.totalorder %s35, 0
      %p334 = por %p332, %p333
      %s335 = ssub.s32 %s37, %s44
      %p336 = scmp.eq.s32.totalorder %s335, 0
      %s338 = sadd.s32 %s337, 1
      %s339 = scalar_select %p336, %s337, %s338
      %p342 = pneg %p336
      %p343 = scmp.eq.s32.totalorder %s29, 3
      %p344 = por %p342, %p343
      %p345 = scmp.ne.s32.totalorder %s337, %s340
      %p346 = scmp.eq.s32.totalorder %s29, 0
      %p347 = por %p345, %p346
      %p348 = scmp.ne.s32.totalorder %s337, %s340
      %p349 = scmp.eq.s32.totalorder %s34, 3
      %p350 = por %p348, %p349
      %p351 = scmp.ne.s32.totalorder %s340, %s341
      %p352 = scmp.eq.s32.totalorder %s34, 0
      %p353 = por %p351, %p352
      %p354 = scmp.ne.s32.totalorder %s340, %s341
      %p355 = scmp.eq.s32.totalorder %s35, 3
      %p356 = por %p354, %p355
      %p358 = scmp.ne.s32.totalorder %s341, %s357
      %p359 = scmp.eq.s32.totalorder %s35, 0
      %p360 = por %p358, %p359
      %s361 = ssub.s32 %s37, %s44
      %p362 = scmp.eq.s32.totalorder %s361, 0
      %s364 = sadd.s32 %s363, 1
      %s365 = scalar_select %p362, %s363, %s364
      %p368 = pneg %p362
      %p369 = scmp.eq.s32.totalorder %s29, 3
      %p370 = por %p368, %p369
      %p371 = scmp.ne.s32.totalorder %s363, %s366
      %p372 = scmp.eq.s32.totalorder %s29, 0
      %p373 = por %p371, %p372
      %p374 = scmp.ne.s32.totalorder %s363, %s366
      %p375 = scmp.eq.s32.totalorder %s34, 3
      %p376 = por %p374, %p375
      %p377 = scmp.ne.s32.totalorder %s366, %s367
      %p378 = scmp.eq.s32.totalorder %s34, 0
      %p379 = por %p377, %p378
      %p380 = scmp.ne.s32.totalorder %s366, %s367
      %p381 = scmp.eq.s32.totalorder %s35, 3
      %p382 = por %p380, %p381
      %p384 = scmp.ne.s32.totalorder %s367, %s383
      %p385 = scmp.eq.s32.totalorder %s35, 0
      %p386 = por %p384, %p385
      %s387 = ssub.s32 %s37, %s44
      %p388 = scmp.eq.s32.totalorder %s387, 0
      %s390 = sadd.s32 %s389, 1
      %s391 = scalar_select %p388, %s389, %s390
      %p394 = pneg %p388
      %p395 = scmp.eq.s32.totalorder %s29, 3
      %p396 = por %p394, %p395
      %p397 = scmp.ne.s32.totalorder %s389, %s392
      %p398 = scmp.eq.s32.totalorder %s29, 0
      %p399 = por %p397, %p398
      %p400 = scmp.ne.s32.totalorder %s389, %s392
      %p401 = scmp.eq.s32.totalorder %s34, 3
      %p402 = por %p400, %p401
      %p403 = scmp.ne.s32.totalorder %s392, %s393
      %p404 = scmp.eq.s32.totalorder %s34, 0
      %p405 = por %p403, %p404
      %p406 = scmp.ne.s32.totalorder %s392, %s393
      %p407 = scmp.eq.s32.totalorder %s35, 3
      %p408 = por %p406, %p407
      %p410 = scmp.ne.s32.totalorder %s393, %s409
      %p411 = scmp.eq.s32.totalorder %s35, 0
      %p412 = por %p410, %p411
      %s413 = ssub.s32 %s36, %s48
      %p414 = scmp.eq.s32.totalorder %s413, 0
      %s416 = sadd.s32 %s415, 1
      %s417 = scalar_select %p414, %s415, %s416
      %p420 = pneg %p414
      %p421 = scmp.eq.s32.totalorder %s29, 3
      %p422 = por %p420, %p421
      %p423 = scmp.ne.s32.totalorder %s415, %s418
      %p424 = scmp.eq.s32.totalorder %s29, 0
      %p425 = por %p423, %p424
      %p426 = scmp.ne.s32.totalorder %s415, %s418
      %p427 = scmp.eq.s32.totalorder %s34, 3
      %p428 = por %p426, %p427
      %p429 = scmp.ne.s32.totalorder %s418, %s419
      %p430 = scmp.eq.s32.totalorder %s34, 0
      %p431 = por %p429, %p430
      %p432 = scmp.ne.s32.totalorder %s418, %s419
      %p433 = scmp.eq.s32.totalorder %s35, 3
      %p434 = por %p432, %p433
      %p436 = scmp.ne.s32.totalorder %s419, %s435
      %p437 = scmp.eq.s32.totalorder %s35, 0
      %p438 = por %p436, %p437
      %p439 = scmp.le.s32.totalorder 1, %s29
      %p440 = scmp.lt.s32.totalorder %s29, 5
      %p441 = pnand %p439, %p440
      %p442 = pneg %p441
      // Predicated region
      $region9: #{tpu_custom_call.1} parent=5 // pred_check
        _
      $region10: #{tpu_custom_call.1} parent=5 // pred_check_branch
        %444 = sbr.rel (%p441) target = $region12
      $region11: #{tpu_custom_call.1} parent=5 // pred_region
        %s445 = ssub.s32 %s29, 1
      $region12: #{tpu_custom_call.1} parent=5 // pred_fallthru
        _
      %p446 = scmp.lt.s32.totalorder %s29, 4
      // Predicated region
      $region13: #{tpu_custom_call.1} parent=5 // pred_check
        %p447 = pneg %p446
      $region14: #{tpu_custom_call.1} parent=5 // pred_check_branch
        %449 = sbr.rel (%p447) target = $region16
      $region15: #{tpu_custom_call.1} parent=5 // pred_region
        // Predicated region
        $region17: #{tpu_custom_call.1} parent=15 // pred_check
          %p450 = pneg %p61
        $region18: #{tpu_custom_call.1} parent=15 // pred_check_branch
          %452 = sbr.rel (%p450) target = $region20
        $region19: #{tpu_custom_call.1} parent=15 // pred_region
          %s453 = sand.u32 %s51, 1
          %s454 = scalar_lea.sflag [#allocation4], %s453
          %s455 = sand.u32 %s51, 1
          %s456 = smul.addr %s455, 8
          %s457 = scalar_lea.vmem [#allocation3], %s456
          %s459 = ssub.s32 128, 128
          %460 = vsyncadd %s454, %s459
          %s461 = smul.addr %s36, 128
          %s462 = scalar_lea.hbm %s0, %s461
          %s464 = sshll.u32 %s457, 4
          %s465 = int_to_ptr.vmem [resolvable:$true] %s464
          %467 = dma.hbm_to_vmem [thread:$0]  %s462, 128, %s465, %s454
        $region20: #{tpu_custom_call.1} parent=15 // pred_fallthru
          _
        // Predicated region
        $region21: #{tpu_custom_call.1} parent=15 // pred_check
          %p468 = pneg %p87
        $region22: #{tpu_custom_call.1} parent=15 // pred_check_branch
          %470 = sbr.rel (%p468) target = $region24
        $region23: #{tpu_custom_call.1} parent=15 // pred_region
          %p471 = scmp.lt.s32.totalorder %s36, 1
          %s472 = scalar_select %p471, %s36, 1
          %s473 = scalar_lea.vmem %s1, %s472
        $region24: #{tpu_custom_call.1} parent=15 // pred_fallthru
          _
        // Predicated region
        $region25: #{tpu_custom_call.1} parent=15 // pred_check
          %p474 = pneg %p113
        $region26: #{tpu_custom_call.1} parent=15 // pred_check_branch
          %476 = sbr.rel (%p474) target = $region28
        $region27: #{tpu_custom_call.1} parent=15 // pred_region
          %p477 = scmp.lt.s32.totalorder %s37, 1
          %s478 = scalar_select %p477, %s37, 1
          %s479 = scalar_lea.vmem %s2, %s478
        $region28: #{tpu_custom_call.1} parent=15 // pred_fallthru
          _
        // Predicated region
        $region29: #{tpu_custom_call.1} parent=15 // pred_check
          %p480 = pneg %p139
        $region30: #{tpu_custom_call.1} parent=15 // pred_check_branch
          %482 = sbr.rel (%p480) target = $region32
        $region31: #{tpu_custom_call.1} parent=15 // pred_region
          %p483 = scmp.lt.s32.totalorder %s37, 1
          %s484 = scalar_select %p483, %s37, 1
          %s485 = scalar_lea.vmem %s3, %s484
        $region32: #{tpu_custom_call.1} parent=15 // pred_fallthru
          _
        // Predicated region
        $region33: #{tpu_custom_call.1} parent=15 // pred_check
          %p486 = pneg %p165
        $region34: #{tpu_custom_call.1} parent=15 // pred_check_branch
          %488 = sbr.rel (%p486) target = $region36
        $region35: #{tpu_custom_call.1} parent=15 // pred_region
          %p489 = scmp.lt.s32.totalorder %s37, 1
          %s490 = scalar_select %p489, %s37, 1
          %s491 = smul.addr %s490, 4
          %s492 = smul.addr %s491, 4
          %s493 = scalar_lea.vmem %s4, %s492
        $region36: #{tpu_custom_call.1} parent=15 // pred_fallthru
          _
        // Predicated region
        $region37: #{tpu_custom_call.1} parent=15 // pred_check
          %p494 = pneg %p191
        $region38: #{tpu_custom_call.1} parent=15 // pred_check_branch
          %496 = sbr.rel (%p494) target = $region40
        $region39: #{tpu_custom_call.1} parent=15 // pred_region
          %p497 = scmp.lt.s32.totalorder %s37, 1
          %s498 = scalar_select %p497, %s37, 1
          %s499 = scalar_lea.vmem %s5, %s498
        $region40: #{tpu_custom_call.1} parent=15 // pred_fallthru
          _
        // Predicated region
        $region41: #{tpu_custom_call.1} parent=15 // pred_check
          %p500 = pneg %p217
        $region42: #{tpu_custom_call.1} parent=15 // pred_check_branch
          %502 = sbr.rel (%p500) target = $region44
        $region43: #{tpu_custom_call.1} parent=15 // pred_region
          %p503 = scmp.lt.s32.totalorder %s37, 1
          %s504 = scalar_select %p503, %s37, 1
          %s505 = smul.addr %s504, 4
          %s506 = smul.addr %s505, 4
          %s507 = scalar_lea.vmem %s6, %s506
        $region44: #{tpu_custom_call.1} parent=15 // pred_fallthru
          _
        // Predicated region
        $region45: #{tpu_custom_call.1} parent=15 // pred_check
          %p508 = pneg %p243
        $region46: #{tpu_custom_call.1} parent=15 // pred_check_branch
          %510 = sbr.rel (%p508) target = $region48
        $region47: #{tpu_custom_call.1} parent=15 // pred_region
          %p511 = scmp.lt.s32.totalorder %s37, 1
          %s512 = scalar_select %p511, %s37, 1
          %s513 = scalar_lea.vmem %s7, %s512
        $region48: #{tpu_custom_call.1} parent=15 // pred_fallthru
          _
        // Predicated region
        $region49: #{tpu_custom_call.1} parent=15 // pred_check
          %p514 = pneg %p269
        $region50: #{tpu_custom_call.1} parent=15 // pred_check_branch
          %516 = sbr.rel (%p514) target = $region52
        $region51: #{tpu_custom_call.1} parent=15 // pred_region
          %p517 = scmp.lt.s32.totalorder %s37, 1
          %s518 = scalar_select %p517, %s37, 1
          %s519 = scalar_lea.vmem %s8, %s518
        $region52: #{tpu_custom_call.1} parent=15 // pred_fallthru
          _
        // Predicated region
        $region53: #{tpu_custom_call.1} parent=15 // pred_check
          %p520 = pneg %p295
        $region54: #{tpu_custom_call.1} parent=15 // pred_check_branch
          %522 = sbr.rel (%p520) target = $region56
        $region55: #{tpu_custom_call.1} parent=15 // pred_region
          %s523 = sand.u32 %s29, 1
          %s524 = scalar_lea.sflag [#allocation7], %s523
          %s525 = sand.u32 %s285, 1
          %s526 = scalar_lea.vmem [#allocation6], %s525
          %s528 = ssub.s32 16, 16
          %529 = vsyncadd %s524, %s528
          %s530 = smul.addr %s37, 16
          %s531 = scalar_lea.hbm %s9, %s530
          %s533 = sshll.u32 %s526, 4
          %s534 = int_to_ptr.vmem [resolvable:$true] %s533
          %536 = dma.hbm_to_vmem [thread:$0]  %s531, 16, %s534, %s524
        $region56: #{tpu_custom_call.1} parent=15 // pred_fallthru
          _
        // Predicated region
        $region57: #{tpu_custom_call.1} parent=15 // pred_check
          %p537 = pneg %p321
        $region58: #{tpu_custom_call.1} parent=15 // pred_check_branch
          %539 = sbr.rel (%p537) target = $region60
        $region59: #{tpu_custom_call.1} parent=15 // pred_region
          %p540 = scmp.lt.s32.totalorder %s37, 1
          %s541 = scalar_select %p540, %s37, 1
          %s542 = smul.addr %s541, 4
          %s543 = smul.addr %s542, 4
          %s544 = scalar_lea.vmem %s10, %s543
        $region60: #{tpu_custom_call.1} parent=15 // pred_fallthru
          _
        // Predicated region
        $region61: #{tpu_custom_call.1} parent=15 // pred_check
          %p545 = pneg %p347
        $region62: #{tpu_custom_call.1} parent=15 // pred_check_branch
          %547 = sbr.rel (%p545) target = $region64
        $region63: #{tpu_custom_call.1} parent=15 // pred_region
          %s548 = sand.u32 %s29, 1
          %s549 = scalar_lea.sflag [#allocation7], %s548
          %s550 = sand.u32 %s337, 1
          %s551 = scalar_lea.vmem [#allocation8], %s550
          %s553 = ssub.s32 16, 16
          %554 = vsyncadd %s549, %s553
          %s555 = smul.addr %s37, 16
          %s556 = scalar_lea.hbm %s11, %s555
          %s558 = sshll.u32 %s551, 4
          %s559 = int_to_ptr.vmem [resolvable:$true] %s558
          %561 = dma.hbm_to_vmem [thread:$0]  %s556, 16, %s559, %s549
        $region64: #{tpu_custom_call.1} parent=15 // pred_fallthru
          _
        // Predicated region
        $region65: #{tpu_custom_call.1} parent=15 // pred_check
          %p562 = pneg %p373
        $region66: #{tpu_custom_call.1} parent=15 // pred_check_branch
          %564 = sbr.rel (%p562) target = $region68
        $region67: #{tpu_custom_call.1} parent=15 // pred_region
          %p565 = scmp.lt.s32.totalorder %s37, 1
          %s566 = scalar_select %p565, %s37, 1
          %s567 = smul.addr %s566, 8
          %s568 = smul.addr %s567, 4
          %s569 = scalar_lea.vmem %s12, %s568
        $region68: #{tpu_custom_call.1} parent=15 // pred_fallthru
          _
        // Predicated region
        $region69: #{tpu_custom_call.1} parent=15 // pred_check
          %p570 = pneg %p399
        $region70: #{tpu_custom_call.1} parent=15 // pred_check_branch
          %572 = sbr.rel (%p570) target = $region72
        $region71: #{tpu_custom_call.1} parent=15 // pred_region
          %p573 = scmp.lt.s32.totalorder %s37, 1
          %s574 = scalar_select %p573, %s37, 1
          %s575 = scalar_lea.vmem %s13, %s574
        $region72: #{tpu_custom_call.1} parent=15 // pred_fallthru
          _
      $region16: #{tpu_custom_call.1} parent=5 // pred_fallthru
        _
      %p576 = scmp.le.s32.totalorder 1, %s29
      %p577 = scmp.lt.s32.totalorder %s29, 5
      %p578 = pnand %p576, %p577
      %p579 = pneg %p578
      // Predicated region
      $region73: #{tpu_custom_call.1} parent=5 // pred_check
        _
      $region74: #{tpu_custom_call.1} parent=5 // pred_check_branch
        %581 = sbr.rel (%p578) target = $region76
      $region75: #{tpu_custom_call.1} parent=5 // pred_region
        %s582 = ssub.s32 %s29, 1
        %s583 = sand.u32 %s54, 1
        %s584 = scalar_lea.sflag [#allocation4], %s583
        %s585 = sand.u32 %s54, 1
        %s586 = smul.addr %s585, 8
        %s587 = scalar_lea.vmem [#allocation3], %s586
        // Predicated region
        $region77: #{tpu_custom_call.1} parent=75 // pred_check
          %p588 = pneg %p67
        $region78: #{tpu_custom_call.1} parent=75 // pred_check_branch
          %590 = sbr.rel (%p588) target = $region80
        $region79: #{tpu_custom_call.1} parent=75 // pred_region
          %591 = dma.done %s584, 128
        $region80: #{tpu_custom_call.1} parent=75 // pred_fallthru
          _
        %s592 = sand.u32 %s34, 1
        %s593 = scalar_lea.sflag [#allocation7], %s592
        %s594 = sand.u32 %s288, 1
        %s595 = scalar_lea.vmem [#allocation6], %s594
        // Predicated region
        $region81: #{tpu_custom_call.1} parent=75 // pred_check
          %p596 = pneg %p301
        $region82: #{tpu_custom_call.1} parent=75 // pred_check_branch
          %598 = sbr.rel (%p596) target = $region84
        $region83: #{tpu_custom_call.1} parent=75 // pred_region
          %599 = dma.done %s593, 16
        $region84: #{tpu_custom_call.1} parent=75 // pred_fallthru
          _
        %s600 = sand.u32 %s34, 1
        %s601 = scalar_lea.sflag [#allocation7], %s600
        %s602 = sand.u32 %s340, 1
        %s603 = scalar_lea.vmem [#allocation8], %s602
        // Predicated region
        $region85: #{tpu_custom_call.1} parent=75 // pred_check
          %p604 = pneg %p353
        $region86: #{tpu_custom_call.1} parent=75 // pred_check_branch
          %606 = sbr.rel (%p604) target = $region88
        $region87: #{tpu_custom_call.1} parent=75 // pred_region
          %607 = dma.done %s601, 16
        $region88: #{tpu_custom_call.1} parent=75 // pred_fallthru
          _
        %s608 = sand.u32 %s54, 1
        %s609 = scalar_lea.sflag [#allocation4], %s608
        %s610 = sand.u32 %s54, 1
        %s611 = smul.addr %s610, 8
        %s612 = scalar_lea.vmem [#allocation3], %s611
        %p613 = pneg %p67
        %p614 = pneg %p64
        %p615 = scmp.lt.s32.totalorder %s38, 1
        %s616 = scalar_select %p615, %s38, 1
        %s617 = scalar_lea.vmem %s1, %s616
        %p618 = pneg %p93
        %p619 = pneg %p90
        %p620 = scmp.lt.s32.totalorder %s39, 1
        %s621 = scalar_select %p620, %s39, 1
        %s622 = scalar_lea.vmem %s2, %s621
        %p623 = pneg %p119
        %p624 = pneg %p116
        %p625 = scmp.lt.s32.totalorder %s39, 1
        %s626 = scalar_select %p625, %s39, 1
        %s627 = scalar_lea.vmem %s3, %s626
        %p628 = pneg %p145
        %p629 = pneg %p142
        %p630 = scmp.lt.s32.totalorder %s39, 1
        %s631 = scalar_select %p630, %s39, 1
        %s632 = smul.addr %s631, 4
        %s633 = smul.addr %s632, 4
        %s634 = scalar_lea.vmem %s4, %s633
        %p635 = pneg %p171
        %p636 = pneg %p168
        %p637 = scmp.lt.s32.totalorder %s39, 1
        %s638 = scalar_select %p637, %s39, 1
        %s639 = scalar_lea.vmem %s5, %s638
        %p640 = pneg %p197
        %p641 = pneg %p194
        %p642 = scmp.lt.s32.totalorder %s39, 1
        %s643 = scalar_select %p642, %s39, 1
        %s644 = smul.addr %s643, 4
        %s645 = smul.addr %s644, 4
        %s646 = scalar_lea.vmem %s6, %s645
        %p647 = pneg %p223
        %p648 = pneg %p220
        %p649 = scmp.lt.s32.totalorder %s39, 1
        %s650 = scalar_select %p649, %s39, 1
        %s651 = scalar_lea.vmem %s7, %s650
        %p652 = pneg %p249
        %p653 = pneg %p246
        %p654 = scmp.lt.s32.totalorder %s39, 1
        %s655 = scalar_select %p654, %s39, 1
        %s656 = scalar_lea.vmem %s8, %s655
        %p657 = pneg %p275
        %p658 = pneg %p272
        %s659 = sand.u32 %s34, 1
        %s660 = scalar_lea.sflag [#allocation7], %s659
        %s661 = sand.u32 %s288, 1
        %s662 = scalar_lea.vmem [#allocation6], %s661
        %p663 = pneg %p301
        %p664 = pneg %p298
        %p665 = scmp.lt.s32.totalorder %s39, 1
        %s666 = scalar_select %p665, %s39, 1
        %s667 = smul.addr %s666, 4
        %s668 = smul.addr %s667, 4
        %s669 = scalar_lea.vmem %s10, %s668
        %p670 = pneg %p327
        %p671 = pneg %p324
        %s672 = sand.u32 %s34, 1
        %s673 = scalar_lea.sflag [#allocation7], %s672
        %s674 = sand.u32 %s340, 1
        %s675 = scalar_lea.vmem [#allocation8], %s674
        %p676 = pneg %p353
        %p677 = pneg %p350
        %p678 = scmp.lt.s32.totalorder %s39, 1
        %s679 = scalar_select %p678, %s39, 1
        %s680 = smul.addr %s679, 8
        %s681 = smul.addr %s680, 4
        %s682 = scalar_lea.vmem %s12, %s681
        %p683 = pneg %p379
        %p684 = pneg %p376
        %p685 = scmp.lt.s32.totalorder %s39, 1
        %s686 = scalar_select %p685, %s39, 1
        %s687 = scalar_lea.vmem %s13, %s686
        %p688 = pneg %p405
        %p689 = pneg %p402
        %p690 = pneg %p431
        %p691 = pneg %p428
        %s692 = sand.u32 %s418, 1
        %s693 = scalar_lea.sflag [#allocation5], %s692
        %s694 = sand.u32 %s418, 1
        %s695 = smul.addr %s694, 8
        %s696 = scalar_lea.vmem [#allocation9], %s695
        %p697 = scmp.lt.s32.totalorder %s38, 1
        %s698 = scalar_select %p697, %s38, 1
        %s699 = scalar_lea.vmem %s1, %s698
        %p700 = scmp.lt.s32.totalorder %s39, 1
        %s701 = scalar_select %p700, %s39, 1
        %s702 = scalar_lea.vmem %s2, %s701
        %p703 = scmp.lt.s32.totalorder %s39, 1
        %s704 = scalar_select %p703, %s39, 1
        %s705 = scalar_lea.vmem %s3, %s704
        %p706 = scmp.lt.s32.totalorder %s39, 1
        %s707 = scalar_select %p706, %s39, 1
        %s708 = smul.addr %s707, 4
        %s709 = smul.addr %s708, 4
        %s710 = scalar_lea.vmem %s4, %s709
        %p711 = scmp.lt.s32.totalorder %s39, 1
        %s712 = scalar_select %p711, %s39, 1
        %s713 = scalar_lea.vmem %s5, %s712
        %p714 = scmp.lt.s32.totalorder %s39, 1
        %s715 = scalar_select %p714, %s39, 1
        %s716 = smul.addr %s715, 4
        %s717 = smul.addr %s716, 4
        %s718 = scalar_lea.vmem %s6, %s717
        %p719 = scmp.lt.s32.totalorder %s39, 1
        %s720 = scalar_select %p719, %s39, 1
        %s721 = scalar_lea.vmem %s7, %s720
        %p722 = scmp.lt.s32.totalorder %s39, 1
        %s723 = scalar_select %p722, %s39, 1
        %s724 = scalar_lea.vmem %s8, %s723
        %p725 = scmp.lt.s32.totalorder %s39, 1
        %s726 = scalar_select %p725, %s39, 1
        %s727 = smul.addr %s726, 4
        %s728 = smul.addr %s727, 4
        %s729 = scalar_lea.vmem %s10, %s728
        %p730 = scmp.lt.s32.totalorder %s39, 1
        %s731 = scalar_select %p730, %s39, 1
        %s732 = smul.addr %s731, 8
        %s733 = smul.addr %s732, 4
        %s734 = scalar_lea.vmem %s12, %s733
        %p735 = scmp.lt.s32.totalorder %s39, 1
        %s736 = scalar_select %p735, %s39, 1
        %s737 = scalar_lea.vmem %s13, %s736
        %p739 = scmp.eq.s32.totalorder %s39, 0
        // Predicated region
        $region89: #{tpu_custom_call.1} parent=75 // pred_check
          %p740 = pneg %p739
        $region90: #{tpu_custom_call.1} parent=75 // pred_check_branch
          %742 = sbr.rel (%p740) target = $region92
        $region91: #{tpu_custom_call.1} parent=75 // pred_region
          %v743 = vld [vmem:[%s587] sm:$0xff]
          %vm744 = vcmask 261120
          %745 = vst.msk [vmem:[#allocation2] sm:$0xff] %vm744, %v743
        $region92: #{tpu_custom_call.1} parent=75 // pred_fallthru
          _
        %v746 = vld [vmem:[#allocation2] sm:$0xff]
        %v747 = vld [vmem:[%s699] sm:$0x1]
        %v748 = vld [vmem:[%s702] sm:$0x1]
        %v749 = vld [vmem:[%s705] sm:$0x1]
        %vm750 = vcmask 261120
        %v751 = vsel %vm750, %v746, 0.0
        %752 = vadd.xlane.f32.xlu0 %v751
        %v753 = vpop.xlane.xlu0 %752
        %v754 = vrcp.pop 32.0
        %v755 = vmul.f32 %v753, %v754
        %v756 = vsub.f32 %v746, %v755
        %v757 = vmul.f32 %v756, %v756
        %v758 = vsel %vm750, %v757, 0.0
        %759 = vadd.xlane.f32.xlu0 %v758
        %v760 = vpop.xlane.xlu0 %759
        %v761 = vmul.f32 %v760, %v754
        %v762 = vadd.f32 %v761, 1e-05
        %v763 = vrsqrt.pop %v762
        %v764 = vmul.f32 %v756, %v763
        %v766 = vlaneseq
        %v767 = vshrl.u32 %v766, 7
        %v768 = vsub.s32 0, %v767
        %v769 = vrot.slane %v748, %v768
        %v771 = vmul.f32 %v764, %v769
        %v773 = vlaneseq
        %v774 = vshrl.u32 %v773, 7
        %v775 = vsub.s32 0, %v774
        %v776 = vrot.slane %v749, %v775
        %v778 = vadd.f32 %v771, %v776
        %v779 = vpack.c.bf16 %v778, %v778
        %v780 = vld [vmem:[%s710] sm:$0xf]
        %v781 = vld [vmem:[%s710 + $0x4] sm:$0xf]
        %v782 = vld [vmem:[%s710 + $0x8] sm:$0xf]
        %v783 = vld [vmem:[%s710 + $0xc] sm:$0xf]
        %v784 = vld [vmem:[%s713] sm:$0x1]
        %v786 = vlaneseq
        %v787 = vshrl.u32 %v786, 7
        %v788 = vsub.s32 0, %v787
        %v789 = vrot.slane %v784, %v788
        %v795 = vunpack.c.l.b16 %v780
        %v796 = vunpack.c.l.b16 %v781
        %v797 = vunpack.c.l.b16 %v782
        %v798 = vunpack.c.l.b16 %v783
        %v799 = vpack.c.b16 %v796, %v795
        %v800 = vpack.c.b16 %v798, %v797
        %v804 = vsel %vm750, %v779, 0
        %806 = vmatprep.subr.bf16.mxu0 0
        %807 = vmatpush1.bf16.msra.mxu0 %v799
        %808 = vmatprep.subr.bf16.mxu0 0
        %809 = vmatpush1.bf16.msra.mxu0 %v800
        %810 = vmatprep.subr.bf16.mxu0 0
        %811 = vmatpush1.bf16.msra.mxu0 0
        %812 = vmatprep.subr.bf16.mxu0 0
        %813 = vmatpush1.bf16.msra.mxu0 0
        %814 = vmatprep.subr.bf16.mxu0 0
        %815 = vmatpush1.bf16.msra.mxu0 0
        %816 = vmatprep.subr.bf16.mxu0 0
        %817 = vmatpush1.bf16.msra.mxu0 0
        %818 = vmatprep.subr.bf16.mxu0 0
        %819 = vmatpush1.bf16.msra.mxu0 0
        %820 = vmatprep.subr.bf16.mxu0 0
        %821 = vmatpush1.bf16.msra.mxu0 0
        %822 = vmatprep.subr.bf16.mxu0 0
        %823 = vmatpush1.bf16.msra.mxu0 0
        %824 = vmatprep.subr.bf16.mxu0 0
        %825 = vmatpush1.bf16.msra.mxu0 0
        %826 = vmatprep.subr.bf16.mxu0 0
        %827 = vmatpush1.bf16.msra.mxu0 0
        %828 = vmatprep.subr.bf16.mxu0 0
        %829 = vmatpush1.bf16.msra.mxu0 0
        %830 = vmatprep.subr.bf16.mxu0 0
        %831 = vmatpush1.bf16.msra.mxu0 0
        %832 = vmatprep.subr.bf16.mxu0 0
        %833 = vmatpush1.bf16.msra.mxu0 0
        %834 = vmatprep.subr.bf16.mxu0 0
        %835 = vmatpush1.bf16.msra.mxu0 0
        %836 = vmatprep.subr.bf16.mxu0 0
        %837 = vmatpush1.bf16.msra.mxu0 0
        %838 = vmatprep.mubr.bf16.mxu0 0
        %839 = vmatmul.mubr.bf16.gmra.mrb[0].mxu0 %v804
        %v840 = vpop.f32.mrb[0].mxu0
        %v841 = vadd.f32 %v789, %v840
        %v842 = vpop.f32.mrb[0].mxu0
        %v843 = vpop.f32.mrb[0].mxu0
        %v844 = vpop.f32.mrb[0].mxu0
        %845 = vdwg.mxu0
        %v846 = vmul.f32 %v841, 0.35355338
        %848 = vrot.lane.b32.xlu0 %v846, 120
        %v849 = vpop.permute.xlu0 %848
        %851 = vrot.lane.b32.xlu0 %v846, 112
        %v852 = vpop.permute.xlu0 %851
        %854 = vrot.lane.b32.xlu0 %v846, 104
        %v855 = vpop.permute.xlu0 %854
        %v857 = vcombine.low %v846, %v852
        %v858 = vcombine.high %v846, %v852
        %v860 = vunpack.c.l.s4 1983009808
        %v861 = vunpack.c.0.s8 %v860
        %v862 = vlaneseq
        %v863 = vshrl.u32 %v862, 7
        %v864 = vsub.s32 %v861, %v863
        %v865 = vrot.slane %v857, %v864
        %v867 = vunpack.c.l.s4 1983009808
        %v868 = vunpack.c.0.s8 %v867
        %v869 = vlaneseq
        %v870 = vshrl.u32 %v869, 7
        %v871 = vsub.s32 %v868, %v870
        %v872 = vrot.slane %v858, %v871
        %v873 = vcombine.low %v849, %v855
        %v874 = vcombine.high %v849, %v855
        %v876 = vunpack.c.l.s4 1983009808
        %v877 = vunpack.c.0.s8 %v876
        %v878 = vlaneseq
        %v879 = vshrl.u32 %v878, 7
        %v880 = vsub.s32 %v877, %v879
        %v881 = vrot.slane %v873, %v880
        %v883 = vunpack.c.l.s4 1983009808
        %v884 = vunpack.c.0.s8 %v883
        %v885 = vlaneseq
        %v886 = vshrl.u32 %v885, 7
        %v887 = vsub.s32 %v884, %v886
        %v888 = vrot.slane %v874, %v887
        %v889 = vcombine.low %v865, %v881
        %v890 = vcombine.high %v865, %v881
        %v892 = vunpack.c.l.s4 1934713408
        %v893 = vunpack.c.0.s8 %v892
        %v894 = vlaneseq
        %v895 = vshrl.u32 %v894, 7
        %v896 = vsub.s32 %v893, %v895
        %v897 = vrot.slane %v889, %v896
        %v899 = vunpack.c.l.s4 1934713408
        %v900 = vunpack.c.0.s8 %v899
        %v901 = vlaneseq
        %v902 = vshrl.u32 %v901, 7
        %v903 = vsub.s32 %v900, %v902
        %v904 = vrot.slane %v890, %v903
        %v905 = vcombine.low %v872, %v888
        %v906 = vcombine.high %v872, %v888
        %v908 = vunpack.c.l.s4 1934713408
        %v909 = vunpack.c.0.s8 %v908
        %v910 = vlaneseq
        %v911 = vshrl.u32 %v910, 7
        %v912 = vsub.s32 %v909, %v911
        %v913 = vrot.slane %v905, %v912
        %v915 = vunpack.c.l.s4 1934713408
        %v916 = vunpack.c.0.s8 %v915
        %v917 = vlaneseq
        %v918 = vshrl.u32 %v917, 7
        %v919 = vsub.s32 %v916, %v918
        %v920 = vrot.slane %v906, %v919
        %v921 = vcombine.high %v897, 0.0
        %v922 = vcombine.high %v904, 0.0
        %v923 = vcombine.high %v913, 0.0
        %v924 = vcombine.high %v920, 0.0
        %v925 = vcombine.low %v897, %v904
        %v927 = vunpack.c.l.s4 1983009808
        %v928 = vunpack.c.0.s8 %v927
        %v929 = vlaneseq
        %v930 = vshrl.u32 %v929, 7
        %v931 = vsub.s32 %v928, %v930
        %v932 = vrot.slane %v925, %v931
        %v933 = vcombine.low %v921, %v922
        %v935 = vunpack.c.l.s4 1983009808
        %v936 = vunpack.c.0.s8 %v935
        %v937 = vlaneseq
        %v938 = vshrl.u32 %v937, 7
        %v939 = vsub.s32 %v936, %v938
        %v940 = vrot.slane %v933, %v939
        %v941 = vcombine.low %v913, %v920
        %v943 = vunpack.c.l.s4 1983009808
        %v944 = vunpack.c.0.s8 %v943
        %v945 = vlaneseq
        %v946 = vshrl.u32 %v945, 7
        %v947 = vsub.s32 %v944, %v946
        %v948 = vrot.slane %v941, %v947
        %v949 = vcombine.low %v923, %v924
        %v951 = vunpack.c.l.s4 1983009808
        %v952 = vunpack.c.0.s8 %v951
        %v953 = vlaneseq
        %v954 = vshrl.u32 %v953, 7
        %v955 = vsub.s32 %v952, %v954
        %v956 = vrot.slane %v949, %v955
        %v957 = vcombine.low %v932, %v940
        %v958 = vcombine.high %v932, %v940
        %v960 = vunpack.c.l.s4 1934713408
        %v961 = vunpack.c.0.s8 %v960
        %v962 = vlaneseq
        %v963 = vshrl.u32 %v962, 7
        %v964 = vsub.s32 %v961, %v963
        %v965 = vrot.slane %v957, %v964
        %v967 = vunpack.c.l.s4 1934713408
        %v968 = vunpack.c.0.s8 %v967
        %v969 = vlaneseq
        %v970 = vshrl.u32 %v969, 7
        %v971 = vsub.s32 %v968, %v970
        %v972 = vrot.slane %v958, %v971
        %v973 = vcombine.low %v948, %v956
        %v974 = vcombine.high %v948, %v956
        %v976 = vunpack.c.l.s4 1934713408
        %v977 = vunpack.c.0.s8 %v976
        %v978 = vlaneseq
        %v979 = vshrl.u32 %v978, 7
        %v980 = vsub.s32 %v977, %v979
        %v981 = vrot.slane %v973, %v980
        %v983 = vunpack.c.l.s4 1934713408
        %v984 = vunpack.c.0.s8 %v983
        %v985 = vlaneseq
        %v986 = vshrl.u32 %v985, 7
        %v987 = vsub.s32 %v984, %v986
        %v988 = vrot.slane %v974, %v987
        %v989 = vcombine.low %v965, %v981
        %v990 = vcombine.high %v965, %v981
        %v991 = vcombine.low %v972, %v988
        %v992 = vcombine.high %v972, %v988
        %v993 = vpack.c.bf16 %v989, %v989
        %v994 = vpack.c.bf16 %v990, %v990
        %v995 = vpack.c.bf16 %v991, %v991
        %v996 = vpack.c.bf16 %v992, %v992
        %998 = vrot.lane.b32.xlu0 %v841, 120
        %v999 = vpop.permute.xlu0 %998
        %1000 = vrot.lane.b32.xlu0 %v841, 112
        %v1001 = vpop.permute.xlu0 %1000
        %1002 = vrot.lane.b32.xlu0 %v841, 104
        %v1003 = vpop.permute.xlu0 %1002
        %1004 = vrot.lane.b32.xlu0 %v841, 96
        %v1005 = vpop.permute.xlu0 %1004
        %1006 = vrot.lane.b32.xlu0 %v999, 96
        %v1007 = vpop.permute.xlu0 %1006
        %1008 = vrot.lane.b32.xlu0 %v1001, 96
        %v1009 = vpop.permute.xlu0 %1008
        %1010 = vrot.lane.b32.xlu0 %v1003, 96
        %v1011 = vpop.permute.xlu0 %1010
        %v1016 = vcombine.low %v1005, %v1009
        %v1017 = vcombine.high %v1005, %v1009
        %v1019 = vunpack.c.l.s4 1983009808
        %v1020 = vunpack.c.0.s8 %v1019
        %v1021 = vlaneseq
        %v1022 = vshrl.u32 %v1021, 7
        %v1023 = vsub.s32 %v1020, %v1022
        %v1024 = vrot.slane %v1016, %v1023
        %v1026 = vunpack.c.l.s4 1983009808
        %v1027 = vunpack.c.0.s8 %v1026
        %v1028 = vlaneseq
        %v1029 = vshrl.u32 %v1028, 7
        %v1030 = vsub.s32 %v1027, %v1029
        %v1031 = vrot.slane %v1017, %v1030
        %v1032 = vcombine.low %v1007, %v1011
        %v1033 = vcombine.high %v1007, %v1011
        %v1035 = vunpack.c.l.s4 1983009808
        %v1036 = vunpack.c.0.s8 %v1035
        %v1037 = vlaneseq
        %v1038 = vshrl.u32 %v1037, 7
        %v1039 = vsub.s32 %v1036, %v1038
        %v1040 = vrot.slane %v1032, %v1039
        %v1042 = vunpack.c.l.s4 1983009808
        %v1043 = vunpack.c.0.s8 %v1042
        %v1044 = vlaneseq
        %v1045 = vshrl.u32 %v1044, 7
        %v1046 = vsub.s32 %v1043, %v1045
        %v1047 = vrot.slane %v1033, %v1046
        %v1048 = vcombine.low %v1024, %v1040
        %v1049 = vcombine.high %v1024, %v1040
        %v1051 = vunpack.c.l.s4 1934713408
        %v1052 = vunpack.c.0.s8 %v1051
        %v1053 = vlaneseq
        %v1054 = vshrl.u32 %v1053, 7
        %v1055 = vsub.s32 %v1052, %v1054
        %v1056 = vrot.slane %v1048, %v1055
        %v1058 = vunpack.c.l.s4 1934713408
        %v1059 = vunpack.c.0.s8 %v1058
        %v1060 = vlaneseq
        %v1061 = vshrl.u32 %v1060, 7
        %v1062 = vsub.s32 %v1059, %v1061
        %v1063 = vrot.slane %v1049, %v1062
        %v1064 = vcombine.low %v1031, %v1047
        %v1065 = vcombine.high %v1031, %v1047
        %v1067 = vunpack.c.l.s4 1934713408
        %v1068 = vunpack.c.0.s8 %v1067
        %v1069 = vlaneseq
        %v1070 = vshrl.u32 %v1069, 7
        %v1071 = vsub.s32 %v1068, %v1070
        %v1072 = vrot.slane %v1064, %v1071
        %v1074 = vunpack.c.l.s4 1934713408
        %v1075 = vunpack.c.0.s8 %v1074
        %v1076 = vlaneseq
        %v1077 = vshrl.u32 %v1076, 7
        %v1078 = vsub.s32 %v1075, %v1077
        %v1079 = vrot.slane %v1065, %v1078
        %v1080 = vcombine.high %v1056, 0.0
        %v1081 = vcombine.high %v1063, 0.0
        %v1082 = vcombine.high %v1072, 0.0
        %v1083 = vcombine.high %v1079, 0.0
        %v1084 = vcombine.low %v1056, %v1063
        %v1086 = vunpack.c.l.s4 1983009808
        %v1087 = vunpack.c.0.s8 %v1086
        %v1088 = vlaneseq
        %v1089 = vshrl.u32 %v1088, 7
        %v1090 = vsub.s32 %v1087, %v1089
        %v1091 = vrot.slane %v1084, %v1090
        %v1092 = vcombine.low %v1080, %v1081
        %v1094 = vunpack.c.l.s4 1983009808
        %v1095 = vunpack.c.0.s8 %v1094
        %v1096 = vlaneseq
        %v1097 = vshrl.u32 %v1096, 7
        %v1098 = vsub.s32 %v1095, %v1097
        %v1099 = vrot.slane %v1092, %v1098
        %v1100 = vcombine.low %v1072, %v1079
        %v1102 = vunpack.c.l.s4 1983009808
        %v1103 = vunpack.c.0.s8 %v1102
        %v1104 = vlaneseq
        %v1105 = vshrl.u32 %v1104, 7
        %v1106 = vsub.s32 %v1103, %v1105
        %v1107 = vrot.slane %v1100, %v1106
        %v1108 = vcombine.low %v1082, %v1083
        %v1110 = vunpack.c.l.s4 1983009808
        %v1111 = vunpack.c.0.s8 %v1110
        %v1112 = vlaneseq
        %v1113 = vshrl.u32 %v1112, 7
        %v1114 = vsub.s32 %v1111, %v1113
        %v1115 = vrot.slane %v1108, %v1114
        %v1116 = vcombine.low %v1091, %v1099
        %v1117 = vcombine.high %v1091, %v1099
        %v1119 = vunpack.c.l.s4 1934713408
        %v1120 = vunpack.c.0.s8 %v1119
        %v1121 = vlaneseq
        %v1122 = vshrl.u32 %v1121, 7
        %v1123 = vsub.s32 %v1120, %v1122
        %v1124 = vrot.slane %v1116, %v1123
        %v1126 = vunpack.c.l.s4 1934713408
        %v1127 = vunpack.c.0.s8 %v1126
        %v1128 = vlaneseq
        %v1129 = vshrl.u32 %v1128, 7
        %v1130 = vsub.s32 %v1127, %v1129
        %v1131 = vrot.slane %v1117, %v1130
        %v1132 = vcombine.low %v1107, %v1115
        %v1133 = vcombine.high %v1107, %v1115
        %v1135 = vunpack.c.l.s4 1934713408
        %v1136 = vunpack.c.0.s8 %v1135
        %v1137 = vlaneseq
        %v1138 = vshrl.u32 %v1137, 7
        %v1139 = vsub.s32 %v1136, %v1138
        %v1140 = vrot.slane %v1132, %v1139
        %v1142 = vunpack.c.l.s4 1934713408
        %v1143 = vunpack.c.0.s8 %v1142
        %v1144 = vlaneseq
        %v1145 = vshrl.u32 %v1144, 7
        %v1146 = vsub.s32 %v1143, %v1145
        %v1147 = vrot.slane %v1133, %v1146
        %v1148 = vcombine.low %v1124, %v1140
        %v1149 = vcombine.high %v1124, %v1140
        %v1150 = vcombine.low %v1131, %v1147
        %v1151 = vcombine.high %v1131, %v1147
        %v1152 = vpack.c.bf16 %v1148, %v1148
        %v1153 = vpack.c.bf16 %v1149, %v1149
        %v1154 = vpack.c.bf16 %v1150, %v1150
        %v1155 = vpack.c.bf16 %v1151, %v1151
        %1156 = vrot.lane.b32.xlu0 %v841, 64
        %v1157 = vpop.permute.xlu0 %1156
        %1158 = vrot.lane.b32.xlu0 %v999, 64
        %v1159 = vpop.permute.xlu0 %1158
        %1160 = vrot.lane.b32.xlu0 %v1001, 64
        %v1161 = vpop.permute.xlu0 %1160
        %1162 = vrot.lane.b32.xlu0 %v1003, 64
        %v1163 = vpop.permute.xlu0 %1162
        %v1168 = vcombine.low %v1157, %v1161
        %v1169 = vcombine.high %v1157, %v1161
        %v1171 = vunpack.c.l.s4 1983009808
        %v1172 = vunpack.c.0.s8 %v1171
        %v1173 = vlaneseq
        %v1174 = vshrl.u32 %v1173, 7
        %v1175 = vsub.s32 %v1172, %v1174
        %v1176 = vrot.slane %v1168, %v1175
        %v1178 = vunpack.c.l.s4 1983009808
        %v1179 = vunpack.c.0.s8 %v1178
        %v1180 = vlaneseq
        %v1181 = vshrl.u32 %v1180, 7
        %v1182 = vsub.s32 %v1179, %v1181
        %v1183 = vrot.slane %v1169, %v1182
        %v1184 = vcombine.low %v1159, %v1163
        %v1185 = vcombine.high %v1159, %v1163
        %v1187 = vunpack.c.l.s4 1983009808
        %v1188 = vunpack.c.0.s8 %v1187
        %v1189 = vlaneseq
        %v1190 = vshrl.u32 %v1189, 7
        %v1191 = vsub.s32 %v1188, %v1190
        %v1192 = vrot.slane %v1184, %v1191
        %v1194 = vunpack.c.l.s4 1983009808
        %v1195 = vunpack.c.0.s8 %v1194
        %v1196 = vlaneseq
        %v1197 = vshrl.u32 %v1196, 7
        %v1198 = vsub.s32 %v1195, %v1197
        %v1199 = vrot.slane %v1185, %v1198
        %v1200 = vcombine.low %v1176, %v1192
        %v1201 = vcombine.high %v1176, %v1192
        %v1203 = vunpack.c.l.s4 1934713408
        %v1204 = vunpack.c.0.s8 %v1203
        %v1205 = vlaneseq
        %v1206 = vshrl.u32 %v1205, 7
        %v1207 = vsub.s32 %v1204, %v1206
        %v1208 = vrot.slane %v1200, %v1207
        %v1210 = vunpack.c.l.s4 1934713408
        %v1211 = vunpack.c.0.s8 %v1210
        %v1212 = vlaneseq
        %v1213 = vshrl.u32 %v1212, 7
        %v1214 = vsub.s32 %v1211, %v1213
        %v1215 = vrot.slane %v1201, %v1214
        %v1216 = vcombine.low %v1183, %v1199
        %v1217 = vcombine.high %v1183, %v1199
        %v1219 = vunpack.c.l.s4 1934713408
        %v1220 = vunpack.c.0.s8 %v1219
        %v1221 = vlaneseq
        %v1222 = vshrl.u32 %v1221, 7
        %v1223 = vsub.s32 %v1220, %v1222
        %v1224 = vrot.slane %v1216, %v1223
        %v1226 = vunpack.c.l.s4 1934713408
        %v1227 = vunpack.c.0.s8 %v1226
        %v1228 = vlaneseq
        %v1229 = vshrl.u32 %v1228, 7
        %v1230 = vsub.s32 %v1227, %v1229
        %v1231 = vrot.slane %v1217, %v1230
        %v1232 = vcombine.high %v1208, 0.0
        %v1233 = vcombine.high %v1215, 0.0
        %v1234 = vcombine.high %v1224, 0.0
        %v1235 = vcombine.high %v1231, 0.0
        %v1236 = vcombine.low %v1208, %v1215
        %v1238 = vunpack.c.l.s4 1983009808
        %v1239 = vunpack.c.0.s8 %v1238
        %v1240 = vlaneseq
        %v1241 = vshrl.u32 %v1240, 7
        %v1242 = vsub.s32 %v1239, %v1241
        %v1243 = vrot.slane %v1236, %v1242
        %v1244 = vcombine.low %v1232, %v1233
        %v1246 = vunpack.c.l.s4 1983009808
        %v1247 = vunpack.c.0.s8 %v1246
        %v1248 = vlaneseq
        %v1249 = vshrl.u32 %v1248, 7
        %v1250 = vsub.s32 %v1247, %v1249
        %v1251 = vrot.slane %v1244, %v1250
        %v1252 = vcombine.low %v1224, %v1231
        %v1254 = vunpack.c.l.s4 1983009808
        %v1255 = vunpack.c.0.s8 %v1254
        %v1256 = vlaneseq
        %v1257 = vshrl.u32 %v1256, 7
        %v1258 = vsub.s32 %v1255, %v1257
        %v1259 = vrot.slane %v1252, %v1258
        %v1260 = vcombine.low %v1234, %v1235
        %v1262 = vunpack.c.l.s4 1983009808
        %v1263 = vunpack.c.0.s8 %v1262
        %v1264 = vlaneseq
        %v1265 = vshrl.u32 %v1264, 7
        %v1266 = vsub.s32 %v1263, %v1265
        %v1267 = vrot.slane %v1260, %v1266
        %v1268 = vcombine.low %v1243, %v1251
        %v1269 = vcombine.high %v1243, %v1251
        %v1271 = vunpack.c.l.s4 1934713408
        %v1272 = vunpack.c.0.s8 %v1271
        %v1273 = vlaneseq
        %v1274 = vshrl.u32 %v1273, 7
        %v1275 = vsub.s32 %v1272, %v1274
        %v1276 = vrot.slane %v1268, %v1275
        %v1278 = vunpack.c.l.s4 1934713408
        %v1279 = vunpack.c.0.s8 %v1278
        %v1280 = vlaneseq
        %v1281 = vshrl.u32 %v1280, 7
        %v1282 = vsub.s32 %v1279, %v1281
        %v1283 = vrot.slane %v1269, %v1282
        %v1284 = vcombine.low %v1259, %v1267
        %v1285 = vcombine.high %v1259, %v1267
        %v1287 = vunpack.c.l.s4 1934713408
        %v1288 = vunpack.c.0.s8 %v1287
        %v1289 = vlaneseq
        %v1290 = vshrl.u32 %v1289, 7
        %v1291 = vsub.s32 %v1288, %v1290
        %v1292 = vrot.slane %v1284, %v1291
        %v1294 = vunpack.c.l.s4 1934713408
        %v1295 = vunpack.c.0.s8 %v1294
        %v1296 = vlaneseq
        %v1297 = vshrl.u32 %v1296, 7
        %v1298 = vsub.s32 %v1295, %v1297
        %v1299 = vrot.slane %v1285, %v1298
        %v1300 = vcombine.low %v1276, %v1292
        %v1301 = vcombine.high %v1276, %v1292
        %v1302 = vcombine.low %v1283, %v1299
        %v1303 = vcombine.high %v1283, %v1299
        %v1304 = vpack.c.bf16 %v1300, %v1300
        %v1305 = vpack.c.bf16 %v1301, %v1301
        %v1306 = vpack.c.bf16 %v1302, %v1302
        %v1307 = vpack.c.bf16 %v1303, %v1303
        %v1309 = vlaneseq
        %v1310 = vshrl.u32 %v1309, 7
        %v1311 = vsub.s32 0, %v1310
        %v1312 = vrot.slane %v747, %v1311
        %vm1314 = vcmask 64512
        %v1316 = vsel %vm1314, %v993, 0
        %v1319 = vsel %vm1314, %v1152, 0
        %1321 = vmatprep.subr.bf16.mxu0 0
        %1322 = vmatpush1.bf16.xpose.msra.mxu0 %v1319
        %1323 = vmatprep.subr.bf16.mxu0 0
        %1324 = vmatpush1.bf16.xpose.msra.mxu0 0
        %1325 = vmatprep.subr.bf16.mxu0 0
        %1326 = vmatpush1.bf16.xpose.msra.mxu0 0
        %1327 = vmatprep.subr.bf16.mxu0 0
        %1328 = vmatpush1.bf16.xpose.msra.mxu0 0
        %1329 = vmatprep.subr.bf16.mxu0 0
        %1330 = vmatpush1.bf16.xpose.msra.mxu0 0
        %1331 = vmatprep.subr.bf16.mxu0 0
        %1332 = vmatpush1.bf16.xpose.msra.mxu0 0
        %1333 = vmatprep.subr.bf16.mxu0 0
        %1334 = vmatpush1.bf16.xpose.msra.mxu0 0
        %1335 = vmatprep.subr.bf16.mxu0 0
        %1336 = vmatpush1.bf16.xpose.msra.mxu0 0
        %1337 = vmatprep.subr.bf16.mxu0 0
        %1338 = vmatpush1.bf16.xpose.msra.mxu0 0
        %1339 = vmatprep.subr.bf16.mxu0 0
        %1340 = vmatpush1.bf16.xpose.msra.mxu0 0
        %1341 = vmatprep.subr.bf16.mxu0 0
        %1342 = vmatpush1.bf16.xpose.msra.mxu0 0
        %1343 = vmatprep.subr.bf16.mxu0 0
        %1344 = vmatpush1.bf16.xpose.msra.mxu0 0
        %1345 = vmatprep.subr.bf16.mxu0 0
        %1346 = vmatpush1.bf16.xpose.msra.mxu0 0
        %1347 = vmatprep.subr.bf16.mxu0 0
        %1348 = vmatpush1.bf16.xpose.msra.mxu0 0
        %1349 = vmatprep.subr.bf16.mxu0 0
        %1350 = vmatpush1.bf16.xpose.msra.mxu0 0
        %1351 = vmatprep.subr.bf16.mxu0 0
        %1352 = vmatpush1.bf16.xpose.msra.mxu0 0
        %1353 = vmatprep.mubr.bf16.mxu0 0
        %1354 = vmatmul.mubr.bf16.gmra.mrb[0].mxu0 %v1316
        %v1355 = vpop.f32.mrb[0].mxu0
        %v1356 = vadd.f32 %v1312, %v1355
        %v1357 = vpop.f32.mrb[0].mxu0
        %v1358 = vpop.f32.mrb[0].mxu0
        %v1359 = vpop.f32.mrb[0].mxu0
        %1360 = vdwg.mxu0
        %v1362 = vsel %vm1314, %v994, 0
        %v1365 = vsel %vm1314, %v1153, 0
        %1367 = vmatprep.subr.bf16.mxu0 0
        %1368 = vmatpush1.bf16.xpose.msra.mxu0 %v1365
        %1369 = vmatprep.subr.bf16.mxu0 0
        %1370 = vmatpush1.bf16.xpose.msra.mxu0 0
        %1371 = vmatprep.subr.bf16.mxu0 0
        %1372 = vmatpush1.bf16.xpose.msra.mxu0 0
        %1373 = vmatprep.subr.bf16.mxu0 0
        %1374 = vmatpush1.bf16.xpose.msra.mxu0 0
        %1375 = vmatprep.subr.bf16.mxu0 0
        %1376 = vmatpush1.bf16.xpose.msra.mxu0 0
        %1377 = vmatprep.subr.bf16.mxu0 0
        %1378 = vmatpush1.bf16.xpose.msra.mxu0 0
        %1379 = vmatprep.subr.bf16.mxu0 0
        %1380 = vmatpush1.bf16.xpose.msra.mxu0 0
        %1381 = vmatprep.subr.bf16.mxu0 0
        %1382 = vmatpush1.bf16.xpose.msra.mxu0 0
        %1383 = vmatprep.subr.bf16.mxu0 0
        %1384 = vmatpush1.bf16.xpose.msra.mxu0 0
        %1385 = vmatprep.subr.bf16.mxu0 0
        %1386 = vmatpush1.bf16.xpose.msra.mxu0 0
        %1387 = vmatprep.subr.bf16.mxu0 0
        %1388 = vmatpush1.bf16.xpose.msra.mxu0 0
        %1389 = vmatprep.subr.bf16.mxu0 0
        %1390 = vmatpush1.bf16.xpose.msra.mxu0 0
        %1391 = vmatprep.subr.bf16.mxu0 0
        %1392 = vmatpush1.bf16.xpose.msra.mxu0 0
        %1393 = vmatprep.subr.bf16.mxu0 0
        %1394 = vmatpush1.bf16.xpose.msra.mxu0 0
        %1395 = vmatprep.subr.bf16.mxu0 0
        %1396 = vmatpush1.bf16.xpose.msra.mxu0 0
        %1397 = vmatprep.subr.bf16.mxu0 0
        %1398 = vmatpush1.bf16.xpose.msra.mxu0 0
        %1399 = vmatprep.mubr.bf16.mxu0 0
        %1400 = vmatmul.mubr.bf16.gmra.mrb[0].mxu0 %v1362
        %v1401 = vpop.f32.mrb[0].mxu0
        %v1402 = vadd.f32 %v1312, %v1401
        %v1403 = vpop.f32.mrb[0].mxu0
        %v1404 = vpop.f32.mrb[0].mxu0
        %v1405 = vpop.f32.mrb[0].mxu0
        %1406 = vdwg.mxu0
        %v1408 = vsel %vm1314, %v995, 0
        %v1411 = vsel %vm1314, %v1154, 0
        %1413 = vmatprep.subr.bf16.mxu0 0
        %1414 = vmatpush1.bf16.xpose.msra.mxu0 %v1411
        %1415 = vmatprep.subr.bf16.mxu0 0
        %1416 = vmatpush1.bf16.xpose.msra.mxu0 0
        %1417 = vmatprep.subr.bf16.mxu0 0
        %1418 = vmatpush1.bf16.xpose.msra.mxu0 0
        %1419 = vmatprep.subr.bf16.mxu0 0
        %1420 = vmatpush1.bf16.xpose.msra.mxu0 0
        %1421 = vmatprep.subr.bf16.mxu0 0
        %1422 = vmatpush1.bf16.xpose.msra.mxu0 0
        %1423 = vmatprep.subr.bf16.mxu0 0
        %1424 = vmatpush1.bf16.xpose.msra.mxu0 0
        %1425 = vmatprep.subr.bf16.mxu0 0
        %1426 = vmatpush1.bf16.xpose.msra.mxu0 0
        %1427 = vmatprep.subr.bf16.mxu0 0
        %1428 = vmatpush1.bf16.xpose.msra.mxu0 0
        %1429 = vmatprep.subr.bf16.mxu0 0
        %1430 = vmatpush1.bf16.xpose.msra.mxu0 0
        %1431 = vmatprep.subr.bf16.mxu0 0
        %1432 = vmatpush1.bf16.xpose.msra.mxu0 0
        %1433 = vmatprep.subr.bf16.mxu0 0
        %1434 = vmatpush1.bf16.xpose.msra.mxu0 0
        %1435 = vmatprep.subr.bf16.mxu0 0
        %1436 = vmatpush1.bf16.xpose.msra.mxu0 0
        %1437 = vmatprep.subr.bf16.mxu0 0
        %1438 = vmatpush1.bf16.xpose.msra.mxu0 0
        %1439 = vmatprep.subr.bf16.mxu0 0
        %1440 = vmatpush1.bf16.xpose.msra.mxu0 0
        %1441 = vmatprep.subr.bf16.mxu0 0
        %1442 = vmatpush1.bf16.xpose.msra.mxu0 0
        %1443 = vmatprep.subr.bf16.mxu0 0
        %1444 = vmatpush1.bf16.xpose.msra.mxu0 0
        %1445 = vmatprep.mubr.bf16.mxu0 0
        %1446 = vmatmul.mubr.bf16.gmra.mrb[0].mxu0 %v1408
        %v1447 = vpop.f32.mrb[0].mxu0
        %v1448 = vadd.f32 %v1312, %v1447
        %v1449 = vpop.f32.mrb[0].mxu0
        %v1450 = vpop.f32.mrb[0].mxu0
        %v1451 = vpop.f32.mrb[0].mxu0
        %1452 = vdwg.mxu0
        %v1454 = vsel %vm1314, %v996, 0
        %v1457 = vsel %vm1314, %v1155, 0
        %1459 = vmatprep.subr.bf16.mxu0 0
        %1460 = vmatpush1.bf16.xpose.msra.mxu0 %v1457
        %1461 = vmatprep.subr.bf16.mxu0 0
        %1462 = vmatpush1.bf16.xpose.msra.mxu0 0
        %1463 = vmatprep.subr.bf16.mxu0 0
        %1464 = vmatpush1.bf16.xpose.msra.mxu0 0
        %1465 = vmatprep.subr.bf16.mxu0 0
        %1466 = vmatpush1.bf16.xpose.msra.mxu0 0
        %1467 = vmatprep.subr.bf16.mxu0 0
        %1468 = vmatpush1.bf16.xpose.msra.mxu0 0
        %1469 = vmatprep.subr.bf16.mxu0 0
        %1470 = vmatpush1.bf16.xpose.msra.mxu0 0
        %1471 = vmatprep.subr.bf16.mxu0 0
        %1472 = vmatpush1.bf16.xpose.msra.mxu0 0
        %1473 = vmatprep.subr.bf16.mxu0 0
        %1474 = vmatpush1.bf16.xpose.msra.mxu0 0
        %1475 = vmatprep.subr.bf16.mxu0 0
        %1476 = vmatpush1.bf16.xpose.msra.mxu0 0
        %1477 = vmatprep.subr.bf16.mxu0 0
        %1478 = vmatpush1.bf16.xpose.msra.mxu0 0
        %1479 = vmatprep.subr.bf16.mxu0 0
        %1480 = vmatpush1.bf16.xpose.msra.mxu0 0
        %1481 = vmatprep.subr.bf16.mxu0 0
        %1482 = vmatpush1.bf16.xpose.msra.mxu0 0
        %1483 = vmatprep.subr.bf16.mxu0 0
        %1484 = vmatpush1.bf16.xpose.msra.mxu0 0
        %1485 = vmatprep.subr.bf16.mxu0 0
        %1486 = vmatpush1.bf16.xpose.msra.mxu0 0
        %1487 = vmatprep.subr.bf16.mxu0 0
        %1488 = vmatpush1.bf16.xpose.msra.mxu0 0
        %1489 = vmatprep.subr.bf16.mxu0 0
        %1490 = vmatpush1.bf16.xpose.msra.mxu0 0
        %1491 = vmatprep.mubr.bf16.mxu0 0
        %1492 = vmatmul.mubr.bf16.gmra.mrb[0].mxu0 %v1454
        %v1493 = vpop.f32.mrb[0].mxu0
        %v1494 = vadd.f32 %v1312, %v1493
        %v1495 = vpop.f32.mrb[0].mxu0
        %v1496 = vpop.f32.mrb[0].mxu0
        %v1497 = vpop.f32.mrb[0].mxu0
        %1498 = vdwg.mxu0
        %v1499 = vsel %vm1314, %v1356, -inf
        %1500 = vmax.xlane.f32.xlu0 %v1499
        %v1501 = vpop.xlane.xlu0 %1500
        %v1502 = vsel %vm1314, %v1402, -inf
        %1503 = vmax.xlane.f32.xlu0 %v1502
        %v1504 = vpop.xlane.xlu0 %1503
        %v1505 = vsel %vm1314, %v1448, -inf
        %1506 = vmax.xlane.f32.xlu0 %v1505
        %v1507 = vpop.xlane.xlu0 %1506
        %v1508 = vsel %vm1314, %v1494, -inf
        %1509 = vmax.xlane.f32.xlu0 %v1508
        %v1510 = vpop.xlane.xlu0 %1509
        %v1511 = vsub.f32 %v1356, %v1501
        %v1512 = vsub.f32 %v1402, %v1504
        %v1513 = vsub.f32 %v1448, %v1507
        %v1514 = vsub.f32 %v1494, %v1510
        %v1515 = vmul.f32 %v1511, 1.442695
        %v1516 = vpow.pop %v1515
        %v1517 = vmul.f32 %v1512, 1.442695
        %v1518 = vpow.pop %v1517
        %v1519 = vmul.f32 %v1513, 1.442695
        %v1520 = vpow.pop %v1519
        %v1521 = vmul.f32 %v1514, 1.442695
        %v1522 = vpow.pop %v1521
        %v1523 = vsel %vm1314, %v1516, 0.0
        %1524 = vadd.xlane.f32.xlu0 %v1523
        %v1525 = vpop.xlane.xlu0 %1524
        %v1526 = vsel %vm1314, %v1518, 0.0
        %1527 = vadd.xlane.f32.xlu0 %v1526
        %v1528 = vpop.xlane.xlu0 %1527
        %v1529 = vsel %vm1314, %v1520, 0.0
        %1530 = vadd.xlane.f32.xlu0 %v1529
        %v1531 = vpop.xlane.xlu0 %1530
        %v1532 = vsel %vm1314, %v1522, 0.0
        %1533 = vadd.xlane.f32.xlu0 %v1532
        %v1534 = vpop.xlane.xlu0 %1533
        %v1535 = vrcp.pop %v1525
        %v1536 = vrcp.pop %v1528
        %v1537 = vrcp.pop %v1531
        %v1538 = vrcp.pop %v1534
        %v1539 = vmul.f32 %v1516, %v1535
        %v1540 = vmul.f32 %v1518, %v1536
        %v1541 = vmul.f32 %v1520, %v1537
        %v1542 = vmul.f32 %v1522, %v1538
        %v1543 = vpack.c.bf16 %v1539, %v1539
        %v1544 = vpack.c.bf16 %v1540, %v1540
        %v1545 = vpack.c.bf16 %v1541, %v1541
        %v1546 = vpack.c.bf16 %v1542, %v1542
        %v1548 = vsel %vm1314, %v1543, 0
        %vm1550 = vcmask 1043456
        %v1552 = vsel %vm1550, %v1304, 0
        %1554 = vmatprep.subr.bf16.mxu0 0
        %1555 = vmatpush1.bf16.msra.mxu0 %v1552
        %1556 = vmatprep.subr.bf16.mxu0 0
        %1557 = vmatpush1.bf16.msra.mxu0 0
        %1558 = vmatprep.subr.bf16.mxu0 0
        %1559 = vmatpush1.bf16.msra.mxu0 0
        %1560 = vmatprep.subr.bf16.mxu0 0
        %1561 = vmatpush1.bf16.msra.mxu0 0
        %1562 = vmatprep.subr.bf16.mxu0 0
        %1563 = vmatpush1.bf16.msra.mxu0 0
        %1564 = vmatprep.subr.bf16.mxu0 0
        %1565 = vmatpush1.bf16.msra.mxu0 0
        %1566 = vmatprep.subr.bf16.mxu0 0
        %1567 = vmatpush1.bf16.msra.mxu0 0
        %1568 = vmatprep.subr.bf16.mxu0 0
        %1569 = vmatpush1.bf16.msra.mxu0 0
        %1570 = vmatprep.subr.bf16.mxu0 0
        %1571 = vmatpush1.bf16.msra.mxu0 0
        %1572 = vmatprep.subr.bf16.mxu0 0
        %1573 = vmatpush1.bf16.msra.mxu0 0
        %1574 = vmatprep.subr.bf16.mxu0 0
        %1575 = vmatpush1.bf16.msra.mxu0 0
        %1576 = vmatprep.subr.bf16.mxu0 0
        %1577 = vmatpush1.bf16.msra.mxu0 0
        %1578 = vmatprep.subr.bf16.mxu0 0
        %1579 = vmatpush1.bf16.msra.mxu0 0
        %1580 = vmatprep.subr.bf16.mxu0 0
        %1581 = vmatpush1.bf16.msra.mxu0 0
        %1582 = vmatprep.subr.bf16.mxu0 0
        %1583 = vmatpush1.bf16.msra.mxu0 0
        %1584 = vmatprep.subr.bf16.mxu0 0
        %1585 = vmatpush1.bf16.msra.mxu0 0
        %1586 = vmatprep.mubr.bf16.mxu0 0
        %1587 = vmatmul.mubr.bf16.gmra.mrb[0].mxu0 %v1548
        %v1588 = vpop.f32.mrb[0].mxu0
        %v1589 = vadd.f32 0.0, %v1588
        %v1590 = vpop.f32.mrb[0].mxu0
        %v1591 = vpop.f32.mrb[0].mxu0
        %v1592 = vpop.f32.mrb[0].mxu0
        %1593 = vdwg.mxu0
        %v1595 = vsel %vm1314, %v1544, 0
        %v1598 = vsel %vm1550, %v1305, 0
        %1600 = vmatprep.subr.bf16.mxu0 0
        %1601 = vmatpush1.bf16.msra.mxu0 %v1598
        %1602 = vmatprep.subr.bf16.mxu0 0
        %1603 = vmatpush1.bf16.msra.mxu0 0
        %1604 = vmatprep.subr.bf16.mxu0 0
        %1605 = vmatpush1.bf16.msra.mxu0 0
        %1606 = vmatprep.subr.bf16.mxu0 0
        %1607 = vmatpush1.bf16.msra.mxu0 0
        %1608 = vmatprep.subr.bf16.mxu0 0
        %1609 = vmatpush1.bf16.msra.mxu0 0
        %1610 = vmatprep.subr.bf16.mxu0 0
        %1611 = vmatpush1.bf16.msra.mxu0 0
        %1612 = vmatprep.subr.bf16.mxu0 0
        %1613 = vmatpush1.bf16.msra.mxu0 0
        %1614 = vmatprep.subr.bf16.mxu0 0
        %1615 = vmatpush1.bf16.msra.mxu0 0
        %1616 = vmatprep.subr.bf16.mxu0 0
        %1617 = vmatpush1.bf16.msra.mxu0 0
        %1618 = vmatprep.subr.bf16.mxu0 0
        %1619 = vmatpush1.bf16.msra.mxu0 0
        %1620 = vmatprep.subr.bf16.mxu0 0
        %1621 = vmatpush1.bf16.msra.mxu0 0
        %1622 = vmatprep.subr.bf16.mxu0 0
        %1623 = vmatpush1.bf16.msra.mxu0 0
        %1624 = vmatprep.subr.bf16.mxu0 0
        %1625 = vmatpush1.bf16.msra.mxu0 0
        %1626 = vmatprep.subr.bf16.mxu0 0
        %1627 = vmatpush1.bf16.msra.mxu0 0
        %1628 = vmatprep.subr.bf16.mxu0 0
        %1629 = vmatpush1.bf16.msra.mxu0 0
        %1630 = vmatprep.subr.bf16.mxu0 0
        %1631 = vmatpush1.bf16.msra.mxu0 0
        %1632 = vmatprep.mubr.bf16.mxu0 0
        %1633 = vmatmul.mubr.bf16.gmra.mrb[0].mxu0 %v1595
        %v1634 = vpop.f32.mrb[0].mxu0
        %v1635 = vadd.f32 0.0, %v1634
        %v1636 = vpop.f32.mrb[0].mxu0
        %v1637 = vpop.f32.mrb[0].mxu0
        %v1638 = vpop.f32.mrb[0].mxu0
        %1639 = vdwg.mxu0
        %v1641 = vsel %vm1314, %v1545, 0
        %v1644 = vsel %vm1550, %v1306, 0
        %1646 = vmatprep.subr.bf16.mxu0 0
        %1647 = vmatpush1.bf16.msra.mxu0 %v1644
        %1648 = vmatprep.subr.bf16.mxu0 0
        %1649 = vmatpush1.bf16.msra.mxu0 0
        %1650 = vmatprep.subr.bf16.mxu0 0
        %1651 = vmatpush1.bf16.msra.mxu0 0
        %1652 = vmatprep.subr.bf16.mxu0 0
        %1653 = vmatpush1.bf16.msra.mxu0 0
        %1654 = vmatprep.subr.bf16.mxu0 0
        %1655 = vmatpush1.bf16.msra.mxu0 0
        %1656 = vmatprep.subr.bf16.mxu0 0
        %1657 = vmatpush1.bf16.msra.mxu0 0
        %1658 = vmatprep.subr.bf16.mxu0 0
        %1659 = vmatpush1.bf16.msra.mxu0 0
        %1660 = vmatprep.subr.bf16.mxu0 0
        %1661 = vmatpush1.bf16.msra.mxu0 0
        %1662 = vmatprep.subr.bf16.mxu0 0
        %1663 = vmatpush1.bf16.msra.mxu0 0
        %1664 = vmatprep.subr.bf16.mxu0 0
        %1665 = vmatpush1.bf16.msra.mxu0 0
        %1666 = vmatprep.subr.bf16.mxu0 0
        %1667 = vmatpush1.bf16.msra.mxu0 0
        %1668 = vmatprep.subr.bf16.mxu0 0
        %1669 = vmatpush1.bf16.msra.mxu0 0
        %1670 = vmatprep.subr.bf16.mxu0 0
        %1671 = vmatpush1.bf16.msra.mxu0 0
        %1672 = vmatprep.subr.bf16.mxu0 0
        %1673 = vmatpush1.bf16.msra.mxu0 0
        %1674 = vmatprep.subr.bf16.mxu0 0
        %1675 = vmatpush1.bf16.msra.mxu0 0
        %1676 = vmatprep.subr.bf16.mxu0 0
        %1677 = vmatpush1.bf16.msra.mxu0 0
        %1678 = vmatprep.mubr.bf16.mxu0 0
        %1679 = vmatmul.mubr.bf16.gmra.mrb[0].mxu0 %v1641
        %v1680 = vpop.f32.mrb[0].mxu0
        %v1681 = vadd.f32 0.0, %v1680
        %v1682 = vpop.f32.mrb[0].mxu0
        %v1683 = vpop.f32.mrb[0].mxu0
        %v1684 = vpop.f32.mrb[0].mxu0
        %1685 = vdwg.mxu0
        %v1687 = vsel %vm1314, %v1546, 0
        %v1690 = vsel %vm1550, %v1307, 0
        %1692 = vmatprep.subr.bf16.mxu0 0
        %1693 = vmatpush1.bf16.msra.mxu0 %v1690
        %1694 = vmatprep.subr.bf16.mxu0 0
        %1695 = vmatpush1.bf16.msra.mxu0 0
        %1696 = vmatprep.subr.bf16.mxu0 0
        %1697 = vmatpush1.bf16.msra.mxu0 0
        %1698 = vmatprep.subr.bf16.mxu0 0
        %1699 = vmatpush1.bf16.msra.mxu0 0
        %1700 = vmatprep.subr.bf16.mxu0 0
        %1701 = vmatpush1.bf16.msra.mxu0 0
        %1702 = vmatprep.subr.bf16.mxu0 0
        %1703 = vmatpush1.bf16.msra.mxu0 0
        %1704 = vmatprep.subr.bf16.mxu0 0
        %1705 = vmatpush1.bf16.msra.mxu0 0
        %1706 = vmatprep.subr.bf16.mxu0 0
        %1707 = vmatpush1.bf16.msra.mxu0 0
        %1708 = vmatprep.subr.bf16.mxu0 0
        %1709 = vmatpush1.bf16.msra.mxu0 0
        %1710 = vmatprep.subr.bf16.mxu0 0
        %1711 = vmatpush1.bf16.msra.mxu0 0
        %1712 = vmatprep.subr.bf16.mxu0 0
        %1713 = vmatpush1.bf16.msra.mxu0 0
        %1714 = vmatprep.subr.bf16.mxu0 0
        %1715 = vmatpush1.bf16.msra.mxu0 0
        %1716 = vmatprep.subr.bf16.mxu0 0
        %1717 = vmatpush1.bf16.msra.mxu0 0
        %1718 = vmatprep.subr.bf16.mxu0 0
        %1719 = vmatpush1.bf16.msra.mxu0 0
        %1720 = vmatprep.subr.bf16.mxu0 0
        %1721 = vmatpush1.bf16.msra.mxu0 0
        %1722 = vmatprep.subr.bf16.mxu0 0
        %1723 = vmatpush1.bf16.msra.mxu0 0
        %1724 = vmatprep.mubr.bf16.mxu0 0
        %1725 = vmatmul.mubr.bf16.gmra.mrb[0].mxu0 %v1687
        %v1726 = vpop.f32.mrb[0].mxu0
        %v1727 = vadd.f32 0.0, %v1726
        %v1728 = vpop.f32.mrb[0].mxu0
        %v1729 = vpop.f32.mrb[0].mxu0
        %v1730 = vpop.f32.mrb[0].mxu0
        %1731 = vdwg.mxu0
        %v1732 = vcombine.low %v1589, %v1681
        %v1733 = vcombine.high %v1589, %v1681
        %v1735 = vunpack.c.l.s4 1983009808
        %v1736 = vunpack.c.0.s8 %v1735
        %v1737 = vlaneseq
        %v1738 = vshrl.u32 %v1737, 7
        %v1739 = vsub.s32 %v1736, %v1738
        %v1740 = vrot.slane %v1732, %v1739
        %v1742 = vunpack.c.l.s4 1983009808
        %v1743 = vunpack.c.0.s8 %v1742
        %v1744 = vlaneseq
        %v1745 = vshrl.u32 %v1744, 7
        %v1746 = vsub.s32 %v1743, %v1745
        %v1747 = vrot.slane %v1733, %v1746
        %v1748 = vcombine.low %v1635, %v1727
        %v1749 = vcombine.high %v1635, %v1727
        %v1751 = vunpack.c.l.s4 1983009808
        %v1752 = vunpack.c.0.s8 %v1751
        %v1753 = vlaneseq
        %v1754 = vshrl.u32 %v1753, 7
        %v1755 = vsub.s32 %v1752, %v1754
        %v1756 = vrot.slane %v1748, %v1755
        %v1758 = vunpack.c.l.s4 1983009808
        %v1759 = vunpack.c.0.s8 %v1758
        %v1760 = vlaneseq
        %v1761 = vshrl.u32 %v1760, 7
        %v1762 = vsub.s32 %v1759, %v1761
        %v1763 = vrot.slane %v1749, %v1762
        %v1764 = vcombine.low %v1740, %v1756
        %v1765 = vcombine.high %v1740, %v1756
        %v1767 = vunpack.c.l.s4 1934713408
        %v1768 = vunpack.c.0.s8 %v1767
        %v1769 = vlaneseq
        %v1770 = vshrl.u32 %v1769, 7
        %v1771 = vsub.s32 %v1768, %v1770
        %v1772 = vrot.slane %v1764, %v1771
        %v1774 = vunpack.c.l.s4 1934713408
        %v1775 = vunpack.c.0.s8 %v1774
        %v1776 = vlaneseq
        %v1777 = vshrl.u32 %v1776, 7
        %v1778 = vsub.s32 %v1775, %v1777
        %v1779 = vrot.slane %v1765, %v1778
        %v1780 = vcombine.low %v1747, %v1763
        %v1781 = vcombine.high %v1747, %v1763
        %v1783 = vunpack.c.l.s4 1934713408
        %v1784 = vunpack.c.0.s8 %v1783
        %v1785 = vlaneseq
        %v1786 = vshrl.u32 %v1785, 7
        %v1787 = vsub.s32 %v1784, %v1786
        %v1788 = vrot.slane %v1780, %v1787
        %v1790 = vunpack.c.l.s4 1934713408
        %v1791 = vunpack.c.0.s8 %v1790
        %v1792 = vlaneseq
        %v1793 = vshrl.u32 %v1792, 7
        %v1794 = vsub.s32 %v1791, %v1793
        %v1795 = vrot.slane %v1781, %v1794
        %v1796 = vcombine.high %v1772, 0.0
        %v1797 = vcombine.high %v1779, 0.0
        %v1798 = vcombine.high %v1788, 0.0
        %v1799 = vcombine.high %v1795, 0.0
        %v1800 = vcombine.low %v1772, %v1779
        %v1802 = vunpack.c.l.s4 1983009808
        %v1803 = vunpack.c.0.s8 %v1802
        %v1804 = vlaneseq
        %v1805 = vshrl.u32 %v1804, 7
        %v1806 = vsub.s32 %v1803, %v1805
        %v1807 = vrot.slane %v1800, %v1806
        %v1808 = vcombine.low %v1796, %v1797
        %v1810 = vunpack.c.l.s4 1983009808
        %v1811 = vunpack.c.0.s8 %v1810
        %v1812 = vlaneseq
        %v1813 = vshrl.u32 %v1812, 7
        %v1814 = vsub.s32 %v1811, %v1813
        %v1815 = vrot.slane %v1808, %v1814
        %v1816 = vcombine.low %v1788, %v1795
        %v1818 = vunpack.c.l.s4 1983009808
        %v1819 = vunpack.c.0.s8 %v1818
        %v1820 = vlaneseq
        %v1821 = vshrl.u32 %v1820, 7
        %v1822 = vsub.s32 %v1819, %v1821
        %v1823 = vrot.slane %v1816, %v1822
        %v1824 = vcombine.low %v1798, %v1799
        %v1826 = vunpack.c.l.s4 1983009808
        %v1827 = vunpack.c.0.s8 %v1826
        %v1828 = vlaneseq
        %v1829 = vshrl.u32 %v1828, 7
        %v1830 = vsub.s32 %v1827, %v1829
        %v1831 = vrot.slane %v1824, %v1830
        %v1832 = vcombine.low %v1807, %v1815
        %v1833 = vcombine.high %v1807, %v1815
        %v1835 = vunpack.c.l.s4 1934713408
        %v1836 = vunpack.c.0.s8 %v1835
        %v1837 = vlaneseq
        %v1838 = vshrl.u32 %v1837, 7
        %v1839 = vsub.s32 %v1836, %v1838
        %v1840 = vrot.slane %v1832, %v1839
        %v1842 = vunpack.c.l.s4 1934713408
        %v1843 = vunpack.c.0.s8 %v1842
        %v1844 = vlaneseq
        %v1845 = vshrl.u32 %v1844, 7
        %v1846 = vsub.s32 %v1843, %v1845
        %v1847 = vrot.slane %v1833, %v1846
        %v1848 = vcombine.low %v1823, %v1831
        %v1849 = vcombine.high %v1823, %v1831
        %v1851 = vunpack.c.l.s4 1934713408
        %v1852 = vunpack.c.0.s8 %v1851
        %v1853 = vlaneseq
        %v1854 = vshrl.u32 %v1853, 7
        %v1855 = vsub.s32 %v1852, %v1854
        %v1856 = vrot.slane %v1848, %v1855
        %v1858 = vunpack.c.l.s4 1934713408
        %v1859 = vunpack.c.0.s8 %v1858
        %v1860 = vlaneseq
        %v1861 = vshrl.u32 %v1860, 7
        %v1862 = vsub.s32 %v1859, %v1861
        %v1863 = vrot.slane %v1849, %v1862
        %v1864 = vcombine.low %v1840, %v1856
        %v1865 = vcombine.high %v1840, %v1856
        %v1866 = vcombine.low %v1847, %v1863
        %v1867 = vcombine.high %v1847, %v1863
        %1869 = vrot.lane.b32.xlu0 %v1865, 8
        %v1870 = vpop.permute.xlu0 %1869
        %1873 = vrot.lane.b32.xlu0 %v1866, 16
        %v1874 = vpop.permute.xlu0 %1873
        %1877 = vrot.lane.b32.xlu0 %v1867, 24
        %v1878 = vpop.permute.xlu0 %1877
        %v1880 = vsel %vm1314, %v1864, %v1870
        %vm1881 = vcmask 130048
        %v1882 = vsel %vm1881, %v1880, %v1874
        %vm1883 = vcmask 195584
        %v1884 = vsel %vm1883, %v1882, %v1878
        %v1885 = vpack.c.bf16 %v1884, %v1884
        %v1886 = vld [vmem:[%s718] sm:$0xf]
        %v1887 = vld [vmem:[%s718 + $0x4] sm:$0xf]
        %v1888 = vld [vmem:[%s718 + $0x8] sm:$0xf]
        %v1889 = vld [vmem:[%s718 + $0xc] sm:$0xf]
        %v1890 = vld [vmem:[%s721] sm:$0x1]
        %v1892 = vlaneseq
        %v1893 = vshrl.u32 %v1892, 7
        %v1894 = vsub.s32 0, %v1893
        %v1895 = vrot.slane %v1890, %v1894
        %v1901 = vunpack.c.l.b16 %v1886
        %v1902 = vunpack.c.l.b16 %v1887
        %v1903 = vunpack.c.l.b16 %v1888
        %v1904 = vunpack.c.l.b16 %v1889
        %v1905 = vpack.c.b16 %v1902, %v1901
        %v1906 = vpack.c.b16 %v1904, %v1903
        %v1910 = vsel %vm750, %v1885, 0
        %1912 = vmatprep.subr.bf16.mxu0 0
        %1913 = vmatpush1.bf16.msra.mxu0 %v1905
        %1914 = vmatprep.subr.bf16.mxu0 0
        %1915 = vmatpush1.bf16.msra.mxu0 %v1906
        %1916 = vmatprep.subr.bf16.mxu0 0
        %1917 = vmatpush1.bf16.msra.mxu0 0
        %1918 = vmatprep.subr.bf16.mxu0 0
        %1919 = vmatpush1.bf16.msra.mxu0 0
        %1920 = vmatprep.subr.bf16.mxu0 0
        %1921 = vmatpush1.bf16.msra.mxu0 0
        %1922 = vmatprep.subr.bf16.mxu0 0
        %1923 = vmatpush1.bf16.msra.mxu0 0
        %1924 = vmatprep.subr.bf16.mxu0 0
        %1925 = vmatpush1.bf16.msra.mxu0 0
        %1926 = vmatprep.subr.bf16.mxu0 0
        %1927 = vmatpush1.bf16.msra.mxu0 0
        %1928 = vmatprep.subr.bf16.mxu0 0
        %1929 = vmatpush1.bf16.msra.mxu0 0
        %1930 = vmatprep.subr.bf16.mxu0 0
        %1931 = vmatpush1.bf16.msra.mxu0 0
        %1932 = vmatprep.subr.bf16.mxu0 0
        %1933 = vmatpush1.bf16.msra.mxu0 0
        %1934 = vmatprep.subr.bf16.mxu0 0
        %1935 = vmatpush1.bf16.msra.mxu0 0
        %1936 = vmatprep.subr.bf16.mxu0 0
        %1937 = vmatpush1.bf16.msra.mxu0 0
        %1938 = vmatprep.subr.bf16.mxu0 0
        %1939 = vmatpush1.bf16.msra.mxu0 0
        %1940 = vmatprep.subr.bf16.mxu0 0
        %1941 = vmatpush1.bf16.msra.mxu0 0
        %1942 = vmatprep.subr.bf16.mxu0 0
        %1943 = vmatpush1.bf16.msra.mxu0 0
        %1944 = vmatprep.mubr.bf16.mxu0 0
        %1945 = vmatmul.mubr.bf16.gmra.mrb[0].mxu0 %v1910
        %v1946 = vpop.f32.mrb[0].mxu0
        %v1947 = vadd.f32 %v1895, %v1946
        %v1948 = vpop.f32.mrb[0].mxu0
        %v1949 = vpop.f32.mrb[0].mxu0
        %v1950 = vpop.f32.mrb[0].mxu0
        %1951 = vdwg.mxu0
        %v1952 = vadd.f32 %v746, %v1947
        %v1953 = vld [vmem:[%s724] sm:$0x1]
        %v1954 = vld [vmem:[%s595] sm:$0x1]
        %v1955 = vsel %vm750, %v1952, 0.0
        %1956 = vadd.xlane.f32.xlu0 %v1955
        %v1957 = vpop.xlane.xlu0 %1956
        %v1958 = vmul.f32 %v1957, %v754
        %v1959 = vsub.f32 %v1952, %v1958
        %v1960 = vmul.f32 %v1959, %v1959
        %v1961 = vsel %vm750, %v1960, 0.0
        %1962 = vadd.xlane.f32.xlu0 %v1961
        %v1963 = vpop.xlane.xlu0 %1962
        %v1964 = vmul.f32 %v1963, %v754
        %v1965 = vadd.f32 %v1964, 1e-05
        %v1966 = vrsqrt.pop %v1965
        %v1967 = vmul.f32 %v1959, %v1966
        %v1969 = vlaneseq
        %v1970 = vshrl.u32 %v1969, 7
        %v1971 = vsub.s32 0, %v1970
        %v1972 = vrot.slane %v1953, %v1971
        %v1974 = vmul.f32 %v1967, %v1972
        %v1976 = vlaneseq
        %v1977 = vshrl.u32 %v1976, 7
        %v1978 = vsub.s32 0, %v1977
        %v1979 = vrot.slane %v1954, %v1978
        %v1981 = vadd.f32 %v1974, %v1979
        %v1982 = vpack.c.bf16 %v1981, %v1981
        %v1983 = vld [vmem:[%s729] sm:$0xf]
        %v1984 = vld [vmem:[%s729 + $0x4] sm:$0xf]
        %v1985 = vld [vmem:[%s729 + $0x8] sm:$0xf]
        %v1986 = vld [vmem:[%s729 + $0xc] sm:$0xf]
        %v1987 = vld [vmem:[%s603] sm:$0x1]
        %v1989 = vlaneseq
        %v1990 = vshrl.u32 %v1989, 7
        %v1991 = vsub.s32 0, %v1990
        %v1992 = vrot.slane %v1987, %v1991
        %v1998 = vunpack.c.l.b16 %v1983
        %v1999 = vunpack.c.l.b16 %v1984
        %v2000 = vunpack.c.l.b16 %v1985
        %v2001 = vunpack.c.l.b16 %v1986
        %v2002 = vpack.c.b16 %v1999, %v1998
        %v2003 = vpack.c.b16 %v2001, %v2000
        %v2007 = vsel %vm750, %v1982, 0
        %2009 = vmatprep.subr.bf16.mxu0 0
        %2010 = vmatpush1.bf16.msra.mxu0 %v2002
        %2011 = vmatprep.subr.bf16.mxu0 0
        %2012 = vmatpush1.bf16.msra.mxu0 %v2003
        %2013 = vmatprep.subr.bf16.mxu0 0
        %2014 = vmatpush1.bf16.msra.mxu0 0
        %2015 = vmatprep.subr.bf16.mxu0 0
        %2016 = vmatpush1.bf16.msra.mxu0 0
        %2017 = vmatprep.subr.bf16.mxu0 0
        %2018 = vmatpush1.bf16.msra.mxu0 0
        %2019 = vmatprep.subr.bf16.mxu0 0
        %2020 = vmatpush1.bf16.msra.mxu0 0
        %2021 = vmatprep.subr.bf16.mxu0 0
        %2022 = vmatpush1.bf16.msra.mxu0 0
        %2023 = vmatprep.subr.bf16.mxu0 0
        %2024 = vmatpush1.bf16.msra.mxu0 0
        %2025 = vmatprep.subr.bf16.mxu0 0
        %2026 = vmatpush1.bf16.msra.mxu0 0
        %2027 = vmatprep.subr.bf16.mxu0 0
        %2028 = vmatpush1.bf16.msra.mxu0 0
        %2029 = vmatprep.subr.bf16.mxu0 0
        %2030 = vmatpush1.bf16.msra.mxu0 0
        %2031 = vmatprep.subr.bf16.mxu0 0
        %2032 = vmatpush1.bf16.msra.mxu0 0
        %2033 = vmatprep.subr.bf16.mxu0 0
        %2034 = vmatpush1.bf16.msra.mxu0 0
        %2035 = vmatprep.subr.bf16.mxu0 0
        %2036 = vmatpush1.bf16.msra.mxu0 0
        %2037 = vmatprep.subr.bf16.mxu0 0
        %2038 = vmatpush1.bf16.msra.mxu0 0
        %2039 = vmatprep.subr.bf16.mxu0 0
        %2040 = vmatpush1.bf16.msra.mxu0 0
        %2041 = vmatprep.mubr.bf16.mxu0 0
        %2042 = vmatmul.mubr.bf16.gmra.mrb[0].mxu0 %v2007
        %v2043 = vpop.f32.mrb[0].mxu0
        %v2044 = vadd.f32 %v1992, %v2043
        %v2045 = vpop.f32.mrb[0].mxu0
        %v2046 = vpop.f32.mrb[0].mxu0
        %v2047 = vpop.f32.mrb[0].mxu0
        %2048 = vdwg.mxu0
        %v2049 = vmul.f32 %v2044, %v2044
        %v2050 = vmul.f32 %v2044, %v2049
        %v2051 = vmul.f32 %v2050, 0.044715
        %v2052 = vadd.f32 %v2044, %v2051
        %v2053 = vmul.f32 %v2052, 0.7978846
        %v2054 = vtanh.pop %v2053
        %v2055 = vadd.f32 %v2054, 1.0
        %v2056 = vmul.f32 %v2055, 0.5
        %v2057 = vmul.f32 %v2044, %v2056
        %v2058 = vpack.c.bf16 %v2057, %v2057
        %v2059 = vld [vmem:[%s734] sm:$0xf]
        %v2060 = vld [vmem:[%s734 + $0x4] sm:$0xf]
        %v2061 = vld [vmem:[%s734 + $0x8] sm:$0xf]
        %v2062 = vld [vmem:[%s734 + $0xc] sm:$0xf]
        %v2063 = vld [vmem:[%s734 + $0x10] sm:$0xf]
        %v2064 = vld [vmem:[%s734 + $0x14] sm:$0xf]
        %v2065 = vld [vmem:[%s734 + $0x18] sm:$0xf]
        %v2066 = vld [vmem:[%s734 + $0x1c] sm:$0xf]
        %v2067 = vld [vmem:[%s737] sm:$0x1]
        %v2069 = vlaneseq
        %v2070 = vshrl.u32 %v2069, 7
        %v2071 = vsub.s32 0, %v2070
        %v2072 = vrot.slane %v2067, %v2071
        %v2082 = vunpack.c.l.b16 %v2059
        %v2083 = vunpack.c.l.b16 %v2060
        %v2084 = vunpack.c.l.b16 %v2061
        %v2085 = vunpack.c.l.b16 %v2062
        %v2086 = vunpack.c.l.b16 %v2063
        %v2087 = vunpack.c.l.b16 %v2064
        %v2088 = vunpack.c.l.b16 %v2065
        %v2089 = vunpack.c.l.b16 %v2066
        %v2090 = vpack.c.b16 %v2083, %v2082
        %v2091 = vpack.c.b16 %v2085, %v2084
        %v2092 = vpack.c.b16 %v2087, %v2086
        %v2093 = vpack.c.b16 %v2089, %v2088
        %vm2098 = vcmask 523264
        %v2100 = vsel %vm2098, %v2058, 0
        %2102 = vmatprep.subr.bf16.mxu0 0
        %2103 = vmatpush1.bf16.msra.mxu0 %v2090
        %2104 = vmatprep.subr.bf16.mxu0 0
        %2105 = vmatpush1.bf16.msra.mxu0 %v2091
        %2106 = vmatprep.subr.bf16.mxu0 0
        %2107 = vmatpush1.bf16.msra.mxu0 %v2092
        %2108 = vmatprep.subr.bf16.mxu0 0
        %2109 = vmatpush1.bf16.msra.mxu0 %v2093
        %2110 = vmatprep.subr.bf16.mxu0 0
        %2111 = vmatpush1.bf16.msra.mxu0 0
        %2112 = vmatprep.subr.bf16.mxu0 0
        %2113 = vmatpush1.bf16.msra.mxu0 0
        %2114 = vmatprep.subr.bf16.mxu0 0
        %2115 = vmatpush1.bf16.msra.mxu0 0
        %2116 = vmatprep.subr.bf16.mxu0 0
        %2117 = vmatpush1.bf16.msra.mxu0 0
        %2118 = vmatprep.subr.bf16.mxu0 0
        %2119 = vmatpush1.bf16.msra.mxu0 0
        %2120 = vmatprep.subr.bf16.mxu0 0
        %2121 = vmatpush1.bf16.msra.mxu0 0
        %2122 = vmatprep.subr.bf16.mxu0 0
        %2123 = vmatpush1.bf16.msra.mxu0 0
        %2124 = vmatprep.subr.bf16.mxu0 0
        %2125 = vmatpush1.bf16.msra.mxu0 0
        %2126 = vmatprep.subr.bf16.mxu0 0
        %2127 = vmatpush1.bf16.msra.mxu0 0
        %2128 = vmatprep.subr.bf16.mxu0 0
        %2129 = vmatpush1.bf16.msra.mxu0 0
        %2130 = vmatprep.subr.bf16.mxu0 0
        %2131 = vmatpush1.bf16.msra.mxu0 0
        %2132 = vmatprep.subr.bf16.mxu0 0
        %2133 = vmatpush1.bf16.msra.mxu0 0
        %2134 = vmatprep.mubr.bf16.mxu0 0
        %2135 = vmatmul.mubr.bf16.gmra.mrb[0].mxu0 %v2100
        %v2136 = vpop.f32.mrb[0].mxu0
        %v2137 = vadd.f32 %v2072, %v2136
        %v2138 = vpop.f32.mrb[0].mxu0
        %v2139 = vpop.f32.mrb[0].mxu0
        %v2140 = vpop.f32.mrb[0].mxu0
        %2141 = vdwg.mxu0
        %v2142 = vadd.f32 %v1952, %v2137
        %2143 = vst.msk [vmem:[#allocation2] sm:$0xff] %vm750, %v2142
        %p2144 = scmp.eq.s32.totalorder %s39, 1
        // Predicated region
        $region93: #{tpu_custom_call.1} parent=75 // pred_check
          %p2145 = pneg %p2144
        $region94: #{tpu_custom_call.1} parent=75 // pred_check_branch
          %2147 = sbr.rel (%p2145) target = $region96
        $region95: #{tpu_custom_call.1} parent=75 // pred_region
          %2148 = vst.msk [vmem:[%s696] sm:$0xff] %vm750, %v2142
        $region96: #{tpu_custom_call.1} parent=75 // pred_fallthru
          _
        %s2149 = sand.u32 %s418, 1
        %s2150 = scalar_lea.sflag [#allocation5], %s2149
        %s2151 = sand.u32 %s418, 1
        %s2152 = smul.addr %s2151, 8
        %s2153 = scalar_lea.vmem [#allocation9], %s2152
        // Predicated region
        $region97: #{tpu_custom_call.1} parent=75 // pred_check
          %p2154 = pneg %p428
        $region98: #{tpu_custom_call.1} parent=75 // pred_check_branch
          %2156 = sbr.rel (%p2154) target = $region100
        $region99: #{tpu_custom_call.1} parent=75 // pred_region
          %s2158 = ssub.s32 128, 128
          %2159 = vsyncadd %s2150, %s2158
          %s2160 = smul.addr %s38, 128
          %s2161 = scalar_lea.hbm %s14, %s2160
          %s2163 = sshll.u32 %s2153, 4
          %s2164 = int_to_ptr.vmem [resolvable:$true] %s2163
          %2166 = dma.vmem_to_hbm [thread:$0]  %s2164, 128, %s2161, %s2150
        $region100: #{tpu_custom_call.1} parent=75 // pred_fallthru
          _
      $region76: #{tpu_custom_call.1} parent=5 // pred_fallthru
        _
      %p2167 = scmp.le.s32.totalorder 2, %s29
      // Predicated region
      $region101: #{tpu_custom_call.1} parent=5 // pred_check
        %p2168 = pneg %p2167
      $region102: #{tpu_custom_call.1} parent=5 // pred_check_branch
        %2170 = sbr.rel (%p2168) target = $region104
      $region103: #{tpu_custom_call.1} parent=5 // pred_region
        %s2171 = ssub.s32 %s29, 2
        // Predicated region
        $region105: #{tpu_custom_call.1} parent=103 // pred_check
          %p2172 = pneg %p434
        $region106: #{tpu_custom_call.1} parent=103 // pred_check_branch
          %2174 = sbr.rel (%p2172) target = $region108
        $region107: #{tpu_custom_call.1} parent=103 // pred_region
          %s2175 = sand.u32 %s419, 1
          %s2176 = scalar_lea.sflag [#allocation5], %s2175
          %s2177 = sand.u32 %s419, 1
          %s2178 = smul.addr %s2177, 8
          %s2179 = scalar_lea.vmem [#allocation9], %s2178
          %2180 = dma.done %s2176, 128
        $region108: #{tpu_custom_call.1} parent=103 // pred_fallthru
          _
      $region104: #{tpu_custom_call.1} parent=5 // pred_fallthru
        _
    $region6: #{tpu_custom_call.1} parent=1 // loop_footer
      %s33 = sadd.s32 1, %s29
    $region7: #{tpu_custom_call.1} parent=1 // loop_footer_branch
      %28 = sbr.rel target = $region3
    $region8: #{tpu_custom_call.1} parent=1 // loop_exit
      _
    %2181 = vsyncpa [#allocation4], 1
    %s2182 = scalar_lea.sflag [#allocation4], 1
    %2183 = vsyncpa %s2182, 1
    %2184 = vsyncpa [#allocation7], 1
    %s2185 = scalar_lea.sflag [#allocation7], 1
    %2186 = vsyncpa %s2185, 1
    %2187 = vsyncpa [#allocation5], 1
    %s2188 = scalar_lea.sflag [#allocation5], 1
    %2189 = vsyncpa %s2188, 1

</llo_original>
